<compile_context>
chip_gen: v6e
topology: v6e:2x2x1
jax: 0.10.0
libtpu: 0.0.40
codegen_flags: <defaults>
</compile_context>

<pallas_src>
import jax
import jax.numpy as jnp
from jax.experimental import pallas as pl
from jax.experimental.pallas import tpu as pltpu

C_IN = 1024     # Conv2d(1024 -> 128) in_channels
C_MID = 128     # hidden channels
N_DISC = 10     # conv_disc out_channels
N_CONT = 2      # conv_mu / conv_var out_channels
BN_EPS = 1e-5
MAX_HW_TILE = 1024   # lanes per grid step (multiple of 128); 4 MiB f32 x-block


def _q_kernel(x_ref, w1_ref, b1_ref, wd_ref, bd_ref, wm_ref, bm_ref,
              wv_ref, bv_ref, disc_ref, mu_ref, var_ref):
    # x_ref:  (1, C_IN, t_hw)   activation tile, pixels along lanes
    # w1_ref: (C_MID, C_IN)     conv1 weight with eval-mode BN scale folded in
    # b1_ref: (C_MID, 1)        folded BN shift
    # wd/wm/wv: (n_out, C_MID), bd/bm/bv: (n_out, 1)
    x = x_ref[0]                                                     # (C_IN, t_hw)

    h = jnp.dot(w1_ref[...], x, preferred_element_type=jnp.float32)  # (C_MID, t_hw)
    h = h + b1_ref[...]
    h = jnp.where(h > 0, h, 0.1 * h)                                 # LeakyReLU(0.1)

    disc = jnp.dot(wd_ref[...], h, preferred_element_type=jnp.float32) + bd_ref[...]
    mu   = jnp.dot(wm_ref[...], h, preferred_element_type=jnp.float32) + bm_ref[...]
    logv = jnp.dot(wv_ref[...], h, preferred_element_type=jnp.float32) + bv_ref[...]

    disc_ref[0] = disc.astype(disc_ref.dtype)
    mu_ref[0]   = mu.astype(mu_ref.dtype)
    var_ref[0]  = jnp.exp(logv).astype(var_ref.dtype)


def q_forward(x_nchw, params, *, hw_tile=MAX_HW_TILE):
    """x_nchw: (N, 1024, H, W) float32. params: Q module parameters."""
    (w1, gamma, beta, rmean, rvar, wd, bd, wm, bm, wv, bv) = params
    N, C, H, W = x_nchw.shape
    assert C == C_IN
    HW = H * W

    # ---- fold eval-mode BatchNorm into the bias-free 1x1 conv ----
    scale = (gamma / jnp.sqrt(rvar + BN_EPS)).astype(jnp.float32)          # (C_MID,)
    w1f = (w1.reshape(C_MID, C_IN).astype(jnp.float32) * scale[:, None])   # (C_MID, C_IN)
    b1f = (beta - rmean * scale).reshape(C_MID, 1).astype(jnp.float32)

    wd2 = wd.reshape(N_DISC, C_MID).astype(jnp.float32)
    bd2 = bd.reshape(N_DISC, 1).astype(jnp.float32)
    wm2 = wm.reshape(N_CONT, C_MID).astype(jnp.float32)
    bm2 = bm.reshape(N_CONT, 1).astype(jnp.float32)
    wv2 = wv.reshape(N_CONT, C_MID).astype(jnp.float32)
    bv2 = bv.reshape(N_CONT, 1).astype(jnp.float32)

    # ---- zero-copy (N, C, H*W) view; NO NCHW->NHWC transpose ----
    x3 = x_nchw.reshape(N, C_IN, HW)
    if HW <= hw_tile:
        t_hw = HW                       # full-extent block: (8,128) rule satisfied
        hw_pad = HW
    else:
        t_hw = hw_tile                  # multiple of 128
        hw_pad = pl.cdiv(HW, t_hw) * t_hw
        if hw_pad != HW:                # ragged tail -> zero-pad (sliced off below)
            x3 = jnp.pad(x3, ((0, 0), (0, 0), (0, hw_pad - HW)))

    grid = (N, hw_pad // t_hw)
    const = lambda n, j: (0, 0)         # resident weights/biases: DMA'd once
    tile_map = lambda n, j: (n, 0, j)

    n_head_out = N_DISC + 2 * N_CONT
    flops = 2 * N * hw_pad * (C_IN * C_MID + C_MID * n_head_out)
    bytes_accessed = 4 * (x3.size + w1f.size + C_MID
                          + n_head_out * (C_MID + 1)
                          + N * hw_pad * n_head_out)

    disc3, mu3, var3 = pl.pallas_call(
        _q_kernel,
        out_shape=(
            jax.ShapeDtypeStruct((N, N_DISC, hw_pad), x_nchw.dtype),
            jax.ShapeDtypeStruct((N, N_CONT, hw_pad), x_nchw.dtype),
            jax.ShapeDtypeStruct((N, N_CONT, hw_pad), x_nchw.dtype),
        ),
        grid_spec=pltpu.PrefetchScalarGridSpec(
            num_scalar_prefetch=0,
            grid=grid,
            in_specs=[
                pl.BlockSpec((1, C_IN, t_hw), tile_map),     # activations (streamed)
                pl.BlockSpec((C_MID, C_IN), const),          # folded conv1 weight
                pl.BlockSpec((C_MID, 1), const),             # folded BN shift
                pl.BlockSpec((N_DISC, C_MID), const),        # conv_disc weight
                pl.BlockSpec((N_DISC, 1), const),            # conv_disc bias
                pl.BlockSpec((N_CONT, C_MID), const),        # conv_mu weight
                pl.BlockSpec((N_CONT, 1), const),            # conv_mu bias
                pl.BlockSpec((N_CONT, C_MID), const),        # conv_var weight
                pl.BlockSpec((N_CONT, 1), const),            # conv_var bias
            ],
            out_specs=[
                pl.BlockSpec((1, N_DISC, t_hw), tile_map),
                pl.BlockSpec((1, N_CONT, t_hw), tile_map),
                pl.BlockSpec((1, N_CONT, t_hw), tile_map),
            ],
        ),
        compiler_params=pltpu.CompilerParams(
            dimension_semantics=("parallel", "parallel")),
        cost_estimate=pl.CostEstimate(flops=flops,
                                      transcendentals=N * hw_pad * N_CONT,
                                      bytes_accessed=bytes_accessed),
    )(x3, w1f, b1f, wd2, bd2, wm2, bm2, wv2, bv2)

    # back to NCHW + torch-style .squeeze()
    disc = jnp.squeeze(disc3[:, :, :HW].reshape(N, N_DISC, H, W))
    mu   = jnp.squeeze(mu3[:, :, :HW].reshape(N, N_CONT, H, W))
    var  = jnp.squeeze(var3[:, :, :HW].reshape(N, N_CONT, H, W))
    return disc, mu, var


def reference_forward(x, params):
    """Pure-JAX reference of Q.forward (eval-mode BatchNorm)."""
    (w1, gamma, beta, rmean, rvar, wd, bd, wm, bm, wv, bv) = params
    P = jax.lax.Precision.HIGHEST
    h = jnp.einsum("nchw,oc->nohw", x, w1.reshape(C_MID, C_IN), precision=P)
    scale = gamma / jnp.sqrt(rvar + BN_EPS)
    h = (h - rmean[None, :, None, None]) * scale[None, :, None, None] \
        + beta[None, :, None, None]
    h = jnp.where(h > 0, h, 0.1 * h)

    def head(w, b, n_out):
        return (jnp.einsum("nchw,oc->nohw", h, w.reshape(n_out, C_MID), precision=P)
                + b.reshape(1, n_out, 1, 1))

    disc = head(wd, bd, N_DISC)
    mu = head(wm, bm, N_CONT)
    var = jnp.exp(head(wv, bv, N_CONT))
    return jnp.squeeze(disc), jnp.squeeze(mu), jnp.squeeze(var)


if __name__ == "__main__":
    key = jax.random.PRNGKey(0)
    ks = jax.random.split(key, 12)

    # Small but module-consistent shapes: in_channels must be 1024.
    N, H, W = 2, 4, 4
    x = jax.random.normal(ks[0], (N, C_IN, H, W), dtype=jnp.float32)

    def conv_w(k, out_c, in_c):
        bound = 1.0 / jnp.sqrt(jnp.float32(in_c))
        return jax.random.uniform(k, (out_c, in_c, 1, 1), minval=-bound,
                                  maxval=bound, dtype=jnp.float32)

    def conv_b(k, out_c, in_c):
        bound = 1.0 / jnp.sqrt(jnp.float32(in_c))
        return jax.random.uniform(k, (out_c,), minval=-bound, maxval=bound,
                                  dtype=jnp.float32)

    w1 = conv_w(ks[1], C_MID, C_IN)                                   # bias=False
    gamma = jax.random.uniform(ks[2], (C_MID,), minval=0.5, maxval=1.5,
                               dtype=jnp.float32)
    beta = 0.1 * jax.random.normal(ks[3], (C_MID,), dtype=jnp.float32)
    rmean = 0.1 * jax.random.normal(ks[4], (C_MID,), dtype=jnp.float32)
    rvar = jax.random.uniform(ks[5], (C_MID,), minval=0.5, maxval=1.5,
                              dtype=jnp.float32)
    wd = conv_w(ks[6], N_DISC, C_MID); bd = conv_b(ks[7], N_DISC, C_MID)
    wm = conv_w(ks[8], N_CONT, C_MID); bm = conv_b(ks[9], N_CONT, C_MID)
    wv = conv_w(ks[10], N_CONT, C_MID); bv = conv_b(ks[11], N_CONT, C_MID)

    params = (w1, gamma, beta, rmean, rvar, wd, bd, wm, bm, wv, bv)

    disc, mu, var = jax.jit(q_forward)(x, params)
    disc, mu, var = jax.block_until_ready((disc, mu, var))

    rd, rm, rv = reference_forward(x, params)
    assert disc.shape == (N, N_DISC, H, W)
    assert mu.shape == (N, N_CONT, H, W)
    assert var.shape == (N, N_CONT, H, W)
    assert jnp.allclose(disc, rd, atol=1e-3, rtol=1e-3)
    assert jnp.allclose(mu, rm, atol=1e-3, rtol=1e-3)
    assert jnp.allclose(var, rv, atol=1e-3, rtol=1e-3)

    print("KERNEL_OK")
</pallas_src>

<mosaic_0001>
module attributes {stable_mosaic.version = 11 : i64} {
  func.func @_q_kernel(%arg0: i32, %arg1: i32, %arg2: memref<1x1024x16xf32, #tpu.memory_space<vmem>>, %arg3: memref<128x1024xf32, #tpu.memory_space<vmem>>, %arg4: memref<128x1xf32, #tpu.memory_space<vmem>>, %arg5: memref<10x128xf32, #tpu.memory_space<vmem>>, %arg6: memref<10x1xf32, #tpu.memory_space<vmem>>, %arg7: memref<2x128xf32, #tpu.memory_space<vmem>>, %arg8: memref<2x1xf32, #tpu.memory_space<vmem>>, %arg9: memref<2x128xf32, #tpu.memory_space<vmem>>, %arg10: memref<2x1xf32, #tpu.memory_space<vmem>>, %arg11: memref<1x10x16xf32, #tpu.memory_space<vmem>>, %arg12: memref<1x2x16xf32, #tpu.memory_space<vmem>>, %arg13: memref<1x2x16xf32, #tpu.memory_space<vmem>>) attributes {dimension_semantics = [#tpu.dimension_semantics<parallel>, #tpu.dimension_semantics<parallel>], iteration_bounds = array<i64: 2, 1>, scalar_prefetch = 0 : i64, scratch_operands = 0 : i64, tpu.core_type = #tpu.core_type<tc>, window_params = [{transform_indices = @transform_0, window_bounds = array<i64: 1, 1024, 16>}, {pipeline_mode = #tpu.pipeline_mode<synchronous>, transform_indices = @transform_1, window_bounds = array<i64: 128, 1024>}, {pipeline_mode = #tpu.pipeline_mode<synchronous>, transform_indices = @transform_2, window_bounds = array<i64: 128, 1>}, {pipeline_mode = #tpu.pipeline_mode<synchronous>, transform_indices = @transform_3, window_bounds = array<i64: 10, 128>}, {pipeline_mode = #tpu.pipeline_mode<synchronous>, transform_indices = @transform_4, window_bounds = array<i64: 10, 1>}, {pipeline_mode = #tpu.pipeline_mode<synchronous>, transform_indices = @transform_5, window_bounds = array<i64: 2, 128>}, {pipeline_mode = #tpu.pipeline_mode<synchronous>, transform_indices = @transform_6, window_bounds = array<i64: 2, 1>}, {pipeline_mode = #tpu.pipeline_mode<synchronous>, transform_indices = @transform_7, window_bounds = array<i64: 2, 128>}, {pipeline_mode = #tpu.pipeline_mode<synchronous>, transform_indices = @transform_8, window_bounds = array<i64: 2, 1>}, {transform_indices = @transform_9, window_bounds = array<i64: 1, 10, 16>}, {transform_indices = @transform_10, window_bounds = array<i64: 1, 2, 16>}, {transform_indices = @transform_11, window_bounds = array<i64: 1, 2, 16>}]} {
    %c0 = arith.constant 0 : index
    %c0_0 = arith.constant 0 : index
    %c0_1 = arith.constant 0 : index
    %0 = vector.load %arg2[%c0, %c0_0, %c0_1] : memref<1x1024x16xf32, #tpu.memory_space<vmem>>, vector<1x1024x16xf32>
    %1 = vector.shape_cast %0 : vector<1x1024x16xf32> to vector<1024x16xf32>
    %c0_2 = arith.constant 0 : index
    %c0_3 = arith.constant 0 : index
    %2 = vector.load %arg3[%c0_2, %c0_3] : memref<128x1024xf32, #tpu.memory_space<vmem>>, vector<128x1024xf32>
    %cst = arith.constant dense<0.000000e+00> : vector<128x16xf32>
    %3 = tpu.matmul %2, %1, %cst {dimension_numbers = #tpu.dot_dimension_numbers<[1], [0], [0], [1], [0, 0, 1, 1], [], []>} : vector<128x1024xf32>, vector<1024x16xf32>, vector<128x16xf32> -> vector<128x16xf32>
    %c0_4 = arith.constant 0 : index
    %c0_5 = arith.constant 0 : index
    %4 = vector.load %arg4[%c0_4, %c0_5] : memref<128x1xf32, #tpu.memory_space<vmem>>, vector<128x1xf32>
    %5 = vector.broadcast %4 : vector<128x1xf32> to vector<128x16xf32>
    %6 = arith.addf %3, %5 : vector<128x16xf32>
    %cst_6 = arith.constant 0.000000e+00 : f32
    %7 = vector.broadcast %cst_6 : f32 to vector<128x16xf32>
    %8 = arith.cmpf ogt, %6, %7 : vector<128x16xf32>
    %cst_7 = arith.constant 1.000000e-01 : f32
    %9 = vector.broadcast %cst_7 : f32 to vector<128x16xf32>
    %10 = arith.mulf %9, %6 : vector<128x16xf32>
    %11 = arith.select %8, %6, %10 : vector<128x16xi1>, vector<128x16xf32>
    %c0_8 = arith.constant 0 : index
    %c0_9 = arith.constant 0 : index
    %12 = vector.load %arg5[%c0_8, %c0_9] : memref<10x128xf32, #tpu.memory_space<vmem>>, vector<10x128xf32>
    %cst_10 = arith.constant dense<0.000000e+00> : vector<10x16xf32>
    %13 = tpu.matmul %12, %11, %cst_10 {dimension_numbers = #tpu.dot_dimension_numbers<[1], [0], [0], [1], [0, 0, 1, 1], [], []>} : vector<10x128xf32>, vector<128x16xf32>, vector<10x16xf32> -> vector<10x16xf32>
    %c0_11 = arith.constant 0 : index
    %c0_12 = arith.constant 0 : index
    %14 = vector.load %arg6[%c0_11, %c0_12] : memref<10x1xf32, #tpu.memory_space<vmem>>, vector<10x1xf32>
    %15 = vector.broadcast %14 : vector<10x1xf32> to vector<10x16xf32>
    %16 = arith.addf %13, %15 : vector<10x16xf32>
    %c0_13 = arith.constant 0 : index
    %c0_14 = arith.constant 0 : index
    %17 = vector.load %arg7[%c0_13, %c0_14] : memref<2x128xf32, #tpu.memory_space<vmem>>, vector<2x128xf32>
    %cst_15 = arith.constant dense<0.000000e+00> : vector<2x16xf32>
    %18 = tpu.matmul %17, %11, %cst_15 {dimension_numbers = #tpu.dot_dimension_numbers<[1], [0], [0], [1], [0, 0, 1, 1], [], []>} : vector<2x128xf32>, vector<128x16xf32>, vector<2x16xf32> -> vector<2x16xf32>
    %c0_16 = arith.constant 0 : index
    %c0_17 = arith.constant 0 : index
    %19 = vector.load %arg8[%c0_16, %c0_17] : memref<2x1xf32, #tpu.memory_space<vmem>>, vector<2x1xf32>
    %20 = vector.broadcast %19 : vector<2x1xf32> to vector<2x16xf32>
    %21 = arith.addf %18, %20 : vector<2x16xf32>
    %c0_18 = arith.constant 0 : index
    %c0_19 = arith.constant 0 : index
    %22 = vector.load %arg9[%c0_18, %c0_19] : memref<2x128xf32, #tpu.memory_space<vmem>>, vector<2x128xf32>
    %cst_20 = arith.constant dense<0.000000e+00> : vector<2x16xf32>
    %23 = tpu.matmul %22, %11, %cst_20 {dimension_numbers = #tpu.dot_dimension_numbers<[1], [0], [0], [1], [0, 0, 1, 1], [], []>} : vector<2x128xf32>, vector<128x16xf32>, vector<2x16xf32> -> vector<2x16xf32>
    %c0_21 = arith.constant 0 : index
    %c0_22 = arith.constant 0 : index
    %24 = vector.load %arg10[%c0_21, %c0_22] : memref<2x1xf32, #tpu.memory_space<vmem>>, vector<2x1xf32>
    %25 = vector.broadcast %24 : vector<2x1xf32> to vector<2x16xf32>
    %26 = arith.addf %23, %25 : vector<2x16xf32>
    %c0_23 = arith.constant 0 : index
    %c0_24 = arith.constant 0 : index
    %c0_25 = arith.constant 0 : index
    %27 = vector.load %arg11[%c0_23, %c0_24, %c0_25] : memref<1x10x16xf32, #tpu.memory_space<vmem>>, vector<1x10x16xf32>
    %28 = vector.shape_cast %27 : vector<1x10x16xf32> to vector<10x16xf32>
    %29 = vector.shape_cast %16 : vector<10x16xf32> to vector<1x10x16xf32>
    tpu.vector_store %arg11[%c0_23, %c0_24, %c0_25], %29 {strides = array<i32>} : memref<1x10x16xf32, #tpu.memory_space<vmem>>, vector<1x10x16xf32>,
    %c0_26 = arith.constant 0 : index
    %c0_27 = arith.constant 0 : index
    %c0_28 = arith.constant 0 : index
    %30 = vector.load %arg12[%c0_26, %c0_27, %c0_28] : memref<1x2x16xf32, #tpu.memory_space<vmem>>, vector<1x2x16xf32>
    %31 = vector.shape_cast %30 : vector<1x2x16xf32> to vector<2x16xf32>
    %32 = vector.shape_cast %21 : vector<2x16xf32> to vector<1x2x16xf32>
    tpu.vector_store %arg12[%c0_26, %c0_27, %c0_28], %32 {strides = array<i32>} : memref<1x2x16xf32, #tpu.memory_space<vmem>>, vector<1x2x16xf32>,
    %33 = math.exp %26 : vector<2x16xf32>
    %c0_29 = arith.constant 0 : index
    %c0_30 = arith.constant 0 : index
    %c0_31 = arith.constant 0 : index
    %34 = vector.load %arg13[%c0_29, %c0_30, %c0_31] : memref<1x2x16xf32, #tpu.memory_space<vmem>>, vector<1x2x16xf32>
    %35 = vector.shape_cast %34 : vector<1x2x16xf32> to vector<2x16xf32>
    %36 = vector.shape_cast %33 : vector<2x16xf32> to vector<1x2x16xf32>
    tpu.vector_store %arg13[%c0_29, %c0_30, %c0_31], %36 {strides = array<i32>} : memref<1x2x16xf32, #tpu.memory_space<vmem>>, vector<1x2x16xf32>,
    return
  }
  func.func @transform_0(%arg0: i32, %arg1: i32) -> (i32, i32, i32) {
    %c0_i32 = arith.constant 0 : i32
    %c0_i32_0 = arith.constant 0 : i32
    return %arg0, %c0_i32, %arg1 : i32, i32, i32
  }
  func.func @transform_1(%arg0: i32, %arg1: i32) -> (i32, i32) {
    %c0_i32 = arith.constant 0 : i32
    %c0_i32_0 = arith.constant 0 : i32
    %c0_i32_1 = arith.constant 0 : i32
    return %c0_i32, %c0_i32_0 : i32, i32
  }
  func.func @transform_2(%arg0: i32, %arg1: i32) -> (i32, i32) {
    %c0_i32 = arith.constant 0 : i32
    %c0_i32_0 = arith.constant 0 : i32
    %c0_i32_1 = arith.constant 0 : i32
    return %c0_i32, %c0_i32_0 : i32, i32
  }
  func.func @transform_3(%arg0: i32, %arg1: i32) -> (i32, i32) {
    %c0_i32 = arith.constant 0 : i32
    %c0_i32_0 = arith.constant 0 : i32
    %c0_i32_1 = arith.constant 0 : i32
    return %c0_i32, %c0_i32_0 : i32, i32
  }
  func.func @transform_4(%arg0: i32, %arg1: i32) -> (i32, i32) {
    %c0_i32 = arith.constant 0 : i32
    %c0_i32_0 = arith.constant 0 : i32
    %c0_i32_1 = arith.constant 0 : i32
    return %c0_i32, %c0_i32_0 : i32, i32
  }
  func.func @transform_5(%arg0: i32, %arg1: i32) -> (i32, i32) {
    %c0_i32 = arith.constant 0 : i32
    %c0_i32_0 = arith.constant 0 : i32
    %c0_i32_1 = arith.constant 0 : i32
    return %c0_i32, %c0_i32_0 : i32, i32
  }
  func.func @transform_6(%arg0: i32, %arg1: i32) -> (i32, i32) {
    %c0_i32 = arith.constant 0 : i32
    %c0_i32_0 = arith.constant 0 : i32
    %c0_i32_1 = arith.constant 0 : i32
    return %c0_i32, %c0_i32_0 : i32, i32
  }
  func.func @transform_7(%arg0: i32, %arg1: i32) -> (i32, i32) {
    %c0_i32 = arith.constant 0 : i32
    %c0_i32_0 = arith.constant 0 : i32
    %c0_i32_1 = arith.constant 0 : i32
    return %c0_i32, %c0_i32_0 : i32, i32
  }
  func.func @transform_8(%arg0: i32, %arg1: i32) -> (i32, i32) {
    %c0_i32 = arith.constant 0 : i32
    %c0_i32_0 = arith.constant 0 : i32
    %c0_i32_1 = arith.constant 0 : i32
    return %c0_i32, %c0_i32_0 : i32, i32
  }
  func.func @transform_9(%arg0: i32, %arg1: i32) -> (i32, i32, i32) {
    %c0_i32 = arith.constant 0 : i32
    %c0_i32_0 = arith.constant 0 : i32
    return %arg0, %c0_i32, %arg1 : i32, i32, i32
  }
  func.func @transform_10(%arg0: i32, %arg1: i32) -> (i32, i32, i32) {
    %c0_i32 = arith.constant 0 : i32
    %c0_i32_0 = arith.constant 0 : i32
    return %arg0, %c0_i32, %arg1 : i32, i32, i32
  }
  func.func @transform_11(%arg0: i32, %arg1: i32) -> (i32, i32, i32) {
    %c0_i32 = arith.constant 0 : i32
    %c0_i32_0 = arith.constant 0 : i32
    return %arg0, %c0_i32, %arg1 : i32, i32, i32
  }
}

</mosaic_0001>

<llo_original>
// kernel: q_forward.1
$region0: #{q_forward.1}
  #allocation0 [shape = 'u32[]', space=smem, size = 0x4, offset = 0x4, fixed_abs, tag = 'smem constant byte address 0x4 - core index']
  #allocation1 [shape = 'u32[144,128]{1,0:T(1,128)}', space=vmem, size = 0x12000, scoped, tag = 'internal scratch']
  %s0 = inlined_call_operand.vmem [shape: f32[2,1024,16], index: 0, kind: input, shape index: {}]
  %s1 = inlined_call_operand.vmem [shape: f32[128,1024], index: 1, kind: input, shape index: {}]
  %s2 = inlined_call_operand.vmem [shape: f32[128,1], index: 2, kind: input, shape index: {}]
  %s3 = inlined_call_operand.vmem [shape: f32[10,128], index: 3, kind: input, shape index: {}]
  %s4 = inlined_call_operand.vmem [shape: f32[10,1], index: 4, kind: input, shape index: {}]
  %s5 = inlined_call_operand.vmem [shape: f32[2,128], index: 5, kind: input, shape index: {}]
  %s6 = inlined_call_operand.vmem [shape: f32[2,1], index: 6, kind: input, shape index: {}]
  %s7 = inlined_call_operand.vmem [shape: f32[2,128], index: 7, kind: input, shape index: {}]
  %s8 = inlined_call_operand.vmem [shape: f32[2,1], index: 8, kind: input, shape index: {}]
  %s9 = inlined_call_operand.vmem [shape: f32[2,10,16], index: 9, kind: output, shape index: {0}]
  %s10 = inlined_call_operand.vmem [shape: f32[2,2,16], index: 10, kind: output, shape index: {1}]
  %s11 = inlined_call_operand.vmem [shape: f32[2,2,16], index: 11, kind: output, shape index: {2}]
  %12 = xla_tuple %s9, %s10, %s11
  %s13 = sld [smem:[#allocation0]]
  $region85: #{q_forward.1} parent=0
    _
  %s15 = ssub.s32 1, %s13
  %s16 = scalar_select 0, %s15, %s13
  loop: start=0, step=1, limit=4
  $region2: #{q_forward.1} parent=0 // loop_pre_header
    _
  $region3: #{q_forward.1} parent=0 // loop_header
    %s18 = sphi 0, %s22
    %p19 = scmp.ge.s32.totalorder %s18, 4
    %s25 = sphi 0, %s37
    %s26 = sphi 0, %s33
    %s27 = sphi 0, %s25
    %s28 = sphi 0, %s26
    %s29 = sphi 0, %s27
    %s30 = sphi 0, %s28
    %s42 = sphi 0, %s44
    %s45 = sphi 0, %s42
    %s46 = sphi 0, %s45
    %s62 = sphi 0, %s46
    %s66 = sphi 0, %s66
    %s68 = sphi 0, %s66
    %s69 = sphi 0, %s68
    %s83 = sphi 0, %s69
    %s87 = sphi 0, %s87
    %s89 = sphi 0, %s87
    %s90 = sphi 0, %s89
    %s104 = sphi 0, %s90
    %s108 = sphi 0, %s108
    %s110 = sphi 0, %s108
    %s111 = sphi 0, %s110
    %s125 = sphi 0, %s111
    %s129 = sphi 0, %s129
    %s131 = sphi 0, %s129
    %s132 = sphi 0, %s131
    %s146 = sphi 0, %s132
    %s150 = sphi 0, %s150
    %s152 = sphi 0, %s150
    %s153 = sphi 0, %s152
    %s167 = sphi 0, %s153
    %s171 = sphi 0, %s171
    %s173 = sphi 0, %s171
    %s174 = sphi 0, %s173
    %s188 = sphi 0, %s174
    %s192 = sphi 0, %s192
    %s194 = sphi 0, %s192
    %s195 = sphi 0, %s194
    %s209 = sphi 0, %s195
    %s213 = sphi 0, %s213
    %s215 = sphi 0, %s213
    %s216 = sphi 0, %s215
    %s230 = sphi 0, %s216
    %s238 = sphi 0, %s240
    %s241 = sphi 0, %s238
    %s242 = sphi 0, %s241
    %s258 = sphi 0, %s242
    %s266 = sphi 0, %s268
    %s269 = sphi 0, %s266
    %s270 = sphi 0, %s269
    %s286 = sphi 0, %s270
    %s294 = sphi 0, %s296
    %s297 = sphi 0, %s294
    %s298 = sphi 0, %s297
    %s314 = sphi 0, %s298
  $region4: #{q_forward.1} parent=0 // loop_header_branch
    %21 = sbr.rel (%p19) target = $region8
  $region5: #{q_forward.1} parent=0 // loop_body
    %s23 = ssub.s32 %s18, 1
    %s24 = ssub.s32 %s18, 2
    %s31 = sadd.s32 1, %s26
    %p32 = scmp.ge.s32.totalorder %s31, 1
    %s33 = scalar_select %p32, 0, %s31
    %s34 = sadd.s32 1, %s25
    %s35 = scalar_select %p32, %s34, %s25
    %p36 = scmp.ge.s32.totalorder %s35, 2
    %s37 = scalar_select %p36, 0, %s35
    %s38 = ssub.s32 %s25, %s37
    %s39 = ssub.s32 %s26, %s33
    %s40 = sor.u32 %s38, %s39
    %p41 = scmp.eq.s32.totalorder %s40, 0
    %s43 = sadd.s32 %s42, 1
    %s44 = scalar_select %p41, %s42, %s43
    %p47 = pneg %p41
    %p48 = scmp.eq.s32.totalorder %s18, 1
    %p49 = por %p47, %p48
    %p50 = scmp.ne.s32.totalorder %s42, %s45
    %p51 = scmp.eq.s32.totalorder %s18, 0
    %p52 = por %p50, %p51
    %p53 = scmp.ne.s32.totalorder %s42, %s45
    %p54 = scmp.eq.s32.totalorder %s23, 1
    %p55 = por %p53, %p54
    %p56 = scmp.ne.s32.totalorder %s45, %s46
    %p57 = scmp.eq.s32.totalorder %s23, 0
    %p58 = por %p56, %p57
    %p59 = scmp.ne.s32.totalorder %s45, %s46
    %p60 = scmp.eq.s32.totalorder %s24, 1
    %p61 = por %p59, %p60
    %p63 = scmp.ne.s32.totalorder %s46, %s62
    %p64 = scmp.eq.s32.totalorder %s24, 0
    %p65 = por %p63, %p64
    %s67 = sadd.s32 %s66, 1
    %p70 = scmp.eq.s32.totalorder %s18, 1
    %p71 = scmp.ne.s32.totalorder %s66, %s68
    %p72 = scmp.eq.s32.totalorder %s18, 0
    %p73 = por %p71, %p72
    %p74 = scmp.ne.s32.totalorder %s66, %s68
    %p75 = scmp.eq.s32.totalorder %s23, 1
    %p76 = por %p74, %p75
    %p77 = scmp.ne.s32.totalorder %s68, %s69
    %p78 = scmp.eq.s32.totalorder %s23, 0
    %p79 = por %p77, %p78
    %p80 = scmp.ne.s32.totalorder %s68, %s69
    %p81 = scmp.eq.s32.totalorder %s24, 1
    %p82 = por %p80, %p81
    %p84 = scmp.ne.s32.totalorder %s69, %s83
    %p85 = scmp.eq.s32.totalorder %s24, 0
    %p86 = por %p84, %p85
    %s88 = sadd.s32 %s87, 1
    %p91 = scmp.eq.s32.totalorder %s18, 1
    %p92 = scmp.ne.s32.totalorder %s87, %s89
    %p93 = scmp.eq.s32.totalorder %s18, 0
    %p94 = por %p92, %p93
    %p95 = scmp.ne.s32.totalorder %s87, %s89
    %p96 = scmp.eq.s32.totalorder %s23, 1
    %p97 = por %p95, %p96
    %p98 = scmp.ne.s32.totalorder %s89, %s90
    %p99 = scmp.eq.s32.totalorder %s23, 0
    %p100 = por %p98, %p99
    %p101 = scmp.ne.s32.totalorder %s89, %s90
    %p102 = scmp.eq.s32.totalorder %s24, 1
    %p103 = por %p101, %p102
    %p105 = scmp.ne.s32.totalorder %s90, %s104
    %p106 = scmp.eq.s32.totalorder %s24, 0
    %p107 = por %p105, %p106
    %s109 = sadd.s32 %s108, 1
    %p112 = scmp.eq.s32.totalorder %s18, 1
    %p113 = scmp.ne.s32.totalorder %s108, %s110
    %p114 = scmp.eq.s32.totalorder %s18, 0
    %p115 = por %p113, %p114
    %p116 = scmp.ne.s32.totalorder %s108, %s110
    %p117 = scmp.eq.s32.totalorder %s23, 1
    %p118 = por %p116, %p117
    %p119 = scmp.ne.s32.totalorder %s110, %s111
    %p120 = scmp.eq.s32.totalorder %s23, 0
    %p121 = por %p119, %p120
    %p122 = scmp.ne.s32.totalorder %s110, %s111
    %p123 = scmp.eq.s32.totalorder %s24, 1
    %p124 = por %p122, %p123
    %p126 = scmp.ne.s32.totalorder %s111, %s125
    %p127 = scmp.eq.s32.totalorder %s24, 0
    %p128 = por %p126, %p127
    %s130 = sadd.s32 %s129, 1
    %p133 = scmp.eq.s32.totalorder %s18, 1
    %p134 = scmp.ne.s32.totalorder %s129, %s131
    %p135 = scmp.eq.s32.totalorder %s18, 0
    %p136 = por %p134, %p135
    %p137 = scmp.ne.s32.totalorder %s129, %s131
    %p138 = scmp.eq.s32.totalorder %s23, 1
    %p139 = por %p137, %p138
    %p140 = scmp.ne.s32.totalorder %s131, %s132
    %p141 = scmp.eq.s32.totalorder %s23, 0
    %p142 = por %p140, %p141
    %p143 = scmp.ne.s32.totalorder %s131, %s132
    %p144 = scmp.eq.s32.totalorder %s24, 1
    %p145 = por %p143, %p144
    %p147 = scmp.ne.s32.totalorder %s132, %s146
    %p148 = scmp.eq.s32.totalorder %s24, 0
    %p149 = por %p147, %p148
    %s151 = sadd.s32 %s150, 1
    %p154 = scmp.eq.s32.totalorder %s18, 1
    %p155 = scmp.ne.s32.totalorder %s150, %s152
    %p156 = scmp.eq.s32.totalorder %s18, 0
    %p157 = por %p155, %p156
    %p158 = scmp.ne.s32.totalorder %s150, %s152
    %p159 = scmp.eq.s32.totalorder %s23, 1
    %p160 = por %p158, %p159
    %p161 = scmp.ne.s32.totalorder %s152, %s153
    %p162 = scmp.eq.s32.totalorder %s23, 0
    %p163 = por %p161, %p162
    %p164 = scmp.ne.s32.totalorder %s152, %s153
    %p165 = scmp.eq.s32.totalorder %s24, 1
    %p166 = por %p164, %p165
    %p168 = scmp.ne.s32.totalorder %s153, %s167
    %p169 = scmp.eq.s32.totalorder %s24, 0
    %p170 = por %p168, %p169
    %s172 = sadd.s32 %s171, 1
    %p175 = scmp.eq.s32.totalorder %s18, 1
    %p176 = scmp.ne.s32.totalorder %s171, %s173
    %p177 = scmp.eq.s32.totalorder %s18, 0
    %p178 = por %p176, %p177
    %p179 = scmp.ne.s32.totalorder %s171, %s173
    %p180 = scmp.eq.s32.totalorder %s23, 1
    %p181 = por %p179, %p180
    %p182 = scmp.ne.s32.totalorder %s173, %s174
    %p183 = scmp.eq.s32.totalorder %s23, 0
    %p184 = por %p182, %p183
    %p185 = scmp.ne.s32.totalorder %s173, %s174
    %p186 = scmp.eq.s32.totalorder %s24, 1
    %p187 = por %p185, %p186
    %p189 = scmp.ne.s32.totalorder %s174, %s188
    %p190 = scmp.eq.s32.totalorder %s24, 0
    %p191 = por %p189, %p190
    %s193 = sadd.s32 %s192, 1
    %p196 = scmp.eq.s32.totalorder %s18, 1
    %p197 = scmp.ne.s32.totalorder %s192, %s194
    %p198 = scmp.eq.s32.totalorder %s18, 0
    %p199 = por %p197, %p198
    %p200 = scmp.ne.s32.totalorder %s192, %s194
    %p201 = scmp.eq.s32.totalorder %s23, 1
    %p202 = por %p200, %p201
    %p203 = scmp.ne.s32.totalorder %s194, %s195
    %p204 = scmp.eq.s32.totalorder %s23, 0
    %p205 = por %p203, %p204
    %p206 = scmp.ne.s32.totalorder %s194, %s195
    %p207 = scmp.eq.s32.totalorder %s24, 1
    %p208 = por %p206, %p207
    %p210 = scmp.ne.s32.totalorder %s195, %s209
    %p211 = scmp.eq.s32.totalorder %s24, 0
    %p212 = por %p210, %p211
    %s214 = sadd.s32 %s213, 1
    %p217 = scmp.eq.s32.totalorder %s18, 1
    %p218 = scmp.ne.s32.totalorder %s213, %s215
    %p219 = scmp.eq.s32.totalorder %s18, 0
    %p220 = por %p218, %p219
    %p221 = scmp.ne.s32.totalorder %s213, %s215
    %p222 = scmp.eq.s32.totalorder %s23, 1
    %p223 = por %p221, %p222
    %p224 = scmp.ne.s32.totalorder %s215, %s216
    %p225 = scmp.eq.s32.totalorder %s23, 0
    %p226 = por %p224, %p225
    %p227 = scmp.ne.s32.totalorder %s215, %s216
    %p228 = scmp.eq.s32.totalorder %s24, 1
    %p229 = por %p227, %p228
    %p231 = scmp.ne.s32.totalorder %s216, %s230
    %p232 = scmp.eq.s32.totalorder %s24, 0
    %p233 = por %p231, %p232
    %s234 = ssub.s32 %s25, %s37
    %s235 = ssub.s32 %s26, %s33
    %s236 = sor.u32 %s234, %s235
    %p237 = scmp.eq.s32.totalorder %s236, 0
    %s239 = sadd.s32 %s238, 1
    %s240 = scalar_select %p237, %s238, %s239
    %p243 = pneg %p237
    %p244 = scmp.eq.s32.totalorder %s18, 1
    %p245 = por %p243, %p244
    %p246 = scmp.ne.s32.totalorder %s238, %s241
    %p247 = scmp.eq.s32.totalorder %s18, 0
    %p248 = por %p246, %p247
    %p249 = scmp.ne.s32.totalorder %s238, %s241
    %p250 = scmp.eq.s32.totalorder %s23, 1
    %p251 = por %p249, %p250
    %p252 = scmp.ne.s32.totalorder %s241, %s242
    %p253 = scmp.eq.s32.totalorder %s23, 0
    %p254 = por %p252, %p253
    %p255 = scmp.ne.s32.totalorder %s241, %s242
    %p256 = scmp.eq.s32.totalorder %s24, 1
    %p257 = por %p255, %p256
    %p259 = scmp.ne.s32.totalorder %s242, %s258
    %p260 = scmp.eq.s32.totalorder %s24, 0
    %p261 = por %p259, %p260
    %s262 = ssub.s32 %s25, %s37
    %s263 = ssub.s32 %s26, %s33
    %s264 = sor.u32 %s262, %s263
    %p265 = scmp.eq.s32.totalorder %s264, 0
    %s267 = sadd.s32 %s266, 1
    %s268 = scalar_select %p265, %s266, %s267
    %p271 = pneg %p265
    %p272 = scmp.eq.s32.totalorder %s18, 1
    %p273 = por %p271, %p272
    %p274 = scmp.ne.s32.totalorder %s266, %s269
    %p275 = scmp.eq.s32.totalorder %s18, 0
    %p276 = por %p274, %p275
    %p277 = scmp.ne.s32.totalorder %s266, %s269
    %p278 = scmp.eq.s32.totalorder %s23, 1
    %p279 = por %p277, %p278
    %p280 = scmp.ne.s32.totalorder %s269, %s270
    %p281 = scmp.eq.s32.totalorder %s23, 0
    %p282 = por %p280, %p281
    %p283 = scmp.ne.s32.totalorder %s269, %s270
    %p284 = scmp.eq.s32.totalorder %s24, 1
    %p285 = por %p283, %p284
    %p287 = scmp.ne.s32.totalorder %s270, %s286
    %p288 = scmp.eq.s32.totalorder %s24, 0
    %p289 = por %p287, %p288
    %s290 = ssub.s32 %s25, %s37
    %s291 = ssub.s32 %s26, %s33
    %s292 = sor.u32 %s290, %s291
    %p293 = scmp.eq.s32.totalorder %s292, 0
    %s295 = sadd.s32 %s294, 1
    %s296 = scalar_select %p293, %s294, %s295
    %p299 = pneg %p293
    %p300 = scmp.eq.s32.totalorder %s18, 1
    %p301 = por %p299, %p300
    %p302 = scmp.ne.s32.totalorder %s294, %s297
    %p303 = scmp.eq.s32.totalorder %s18, 0
    %p304 = por %p302, %p303
    %p305 = scmp.ne.s32.totalorder %s294, %s297
    %p306 = scmp.eq.s32.totalorder %s23, 1
    %p307 = por %p305, %p306
    %p308 = scmp.ne.s32.totalorder %s297, %s298
    %p309 = scmp.eq.s32.totalorder %s23, 0
    %p310 = por %p308, %p309
    %p311 = scmp.ne.s32.totalorder %s297, %s298
    %p312 = scmp.eq.s32.totalorder %s24, 1
    %p313 = por %p311, %p312
    %p315 = scmp.ne.s32.totalorder %s298, %s314
    %p316 = scmp.eq.s32.totalorder %s24, 0
    %p317 = por %p315, %p316
    %p318 = scmp.le.s32.totalorder 1, %s18
    %p319 = scmp.lt.s32.totalorder %s18, 3
    %p320 = pnand %p318, %p319
    %p321 = pneg %p320
    // Predicated region
    $region9: #{q_forward.1} parent=5 // pred_check
      _
    $region10: #{q_forward.1} parent=5 // pred_check_branch
      %323 = sbr.rel (%p320) target = $region12
    $region11: #{q_forward.1} parent=5 // pred_region
      %s324 = ssub.s32 %s18, 1
      // Predicated region
      $region13: #{q_forward.1} parent=11 // pred_check
        %p325 = pneg %p79
      $region14: #{q_forward.1} parent=11 // pred_check_branch
        %327 = sbr.rel (%p325) target = $region16
      $region15: #{q_forward.1} parent=11 // pred_region
        _
      $region16: #{q_forward.1} parent=11 // pred_fallthru
        _
      // Predicated region
      $region17: #{q_forward.1} parent=11 // pred_check
        %p328 = pneg %p100
      $region18: #{q_forward.1} parent=11 // pred_check_branch
        %330 = sbr.rel (%p328) target = $region20
      $region19: #{q_forward.1} parent=11 // pred_region
        _
      $region20: #{q_forward.1} parent=11 // pred_fallthru
        _
      // Predicated region
      $region21: #{q_forward.1} parent=11 // pred_check
        %p331 = pneg %p121
      $region22: #{q_forward.1} parent=11 // pred_check_branch
        %333 = sbr.rel (%p331) target = $region24
      $region23: #{q_forward.1} parent=11 // pred_region
        _
      $region24: #{q_forward.1} parent=11 // pred_fallthru
        _
      // Predicated region
      $region25: #{q_forward.1} parent=11 // pred_check
        %p334 = pneg %p142
      $region26: #{q_forward.1} parent=11 // pred_check_branch
        %336 = sbr.rel (%p334) target = $region28
      $region27: #{q_forward.1} parent=11 // pred_region
        _
      $region28: #{q_forward.1} parent=11 // pred_fallthru
        _
      // Predicated region
      $region29: #{q_forward.1} parent=11 // pred_check
        %p337 = pneg %p163
      $region30: #{q_forward.1} parent=11 // pred_check_branch
        %339 = sbr.rel (%p337) target = $region32
      $region31: #{q_forward.1} parent=11 // pred_region
        _
      $region32: #{q_forward.1} parent=11 // pred_fallthru
        _
      // Predicated region
      $region33: #{q_forward.1} parent=11 // pred_check
        %p340 = pneg %p184
      $region34: #{q_forward.1} parent=11 // pred_check_branch
        %342 = sbr.rel (%p340) target = $region36
      $region35: #{q_forward.1} parent=11 // pred_region
        _
      $region36: #{q_forward.1} parent=11 // pred_fallthru
        _
      // Predicated region
      $region37: #{q_forward.1} parent=11 // pred_check
        %p343 = pneg %p205
      $region38: #{q_forward.1} parent=11 // pred_check_branch
        %345 = sbr.rel (%p343) target = $region40
      $region39: #{q_forward.1} parent=11 // pred_region
        _
      $region40: #{q_forward.1} parent=11 // pred_fallthru
        _
      // Predicated region
      $region41: #{q_forward.1} parent=11 // pred_check
        %p346 = pneg %p226
      $region42: #{q_forward.1} parent=11 // pred_check_branch
        %348 = sbr.rel (%p346) target = $region44
      $region43: #{q_forward.1} parent=11 // pred_region
        _
      $region44: #{q_forward.1} parent=11 // pred_fallthru
        _
    $region12: #{q_forward.1} parent=5 // pred_fallthru
      _
    %p349 = scmp.lt.s32.totalorder %s18, 2
    // Predicated region
    $region45: #{q_forward.1} parent=5 // pred_check
      %p350 = pneg %p349
    $region46: #{q_forward.1} parent=5 // pred_check_branch
      %352 = sbr.rel (%p350) target = $region48
    $region47: #{q_forward.1} parent=5 // pred_region
      // Predicated region
      $region49: #{q_forward.1} parent=47 // pred_check
        %p353 = pneg %p52
      $region50: #{q_forward.1} parent=47 // pred_check_branch
        %355 = sbr.rel (%p353) target = $region52
      $region51: #{q_forward.1} parent=47 // pred_region
        %p356 = scmp.lt.s32.totalorder %s25, 1
        %s357 = scalar_select %p356, %s25, 1
        %p358 = scmp.lt.s32.totalorder %s26, 0
        %s359 = scalar_select %p358, %s26, 0
        %s360 = smul.addr %s357, 128
        %s361 = sadd.s32 %s359, %s360
        %s362 = smul.addr %s361, 8
        %s363 = scalar_lea.vmem %s0, %s362
      $region52: #{q_forward.1} parent=47 // pred_fallthru
        _
    $region48: #{q_forward.1} parent=5 // pred_fallthru
      _
    %p364 = scmp.le.s32.totalorder 1, %s18
    %p365 = scmp.lt.s32.totalorder %s18, 3
    %p366 = pnand %p364, %p365
    %p367 = pneg %p366
    // Predicated region
    $region53: #{q_forward.1} parent=5 // pred_check
      _
    $region54: #{q_forward.1} parent=5 // pred_check_branch
      %369 = sbr.rel (%p366) target = $region56
    $region55: #{q_forward.1} parent=5 // pred_region
      %s370 = ssub.s32 %s18, 1
      %p371 = scmp.lt.s32.totalorder %s27, 1
      %s372 = scalar_select %p371, %s27, 1
      %p373 = scmp.lt.s32.totalorder %s28, 0
      %s374 = scalar_select %p373, %s28, 0
      %s375 = smul.addr %s372, 128
      %s376 = sadd.s32 %s374, %s375
      %s377 = smul.addr %s376, 8
      %s378 = scalar_lea.vmem %s0, %s377
      %p379 = pneg %p58
      %p380 = pneg %p55
      %p381 = pneg %p79
      %p382 = pneg %p76
      %p383 = pneg %p100
      %p384 = pneg %p97
      %p385 = pneg %p121
      %p386 = pneg %p118
      %p387 = pneg %p142
      %p388 = pneg %p139
      %p389 = pneg %p163
      %p390 = pneg %p160
      %p391 = pneg %p184
      %p392 = pneg %p181
      %p393 = pneg %p205
      %p394 = pneg %p202
      %p395 = pneg %p226
      %p396 = pneg %p223
      %p397 = pneg %p254
      %p398 = pneg %p251
      %p399 = scmp.lt.s32.totalorder %s27, 1
      %s400 = scalar_select %p399, %s27, 1
      %p401 = scmp.lt.s32.totalorder %s28, 0
      %s402 = scalar_select %p401, %s28, 0
      %s403 = smul.addr %s400, 2
      %s404 = sadd.s32 %s402, %s403
      %s405 = smul.addr %s404, 8
      %s406 = scalar_lea.vmem %s9, %s405
      %p407 = pneg %p282
      %p408 = pneg %p279
      %p409 = scmp.lt.s32.totalorder %s27, 1
      %s410 = scalar_select %p409, %s27, 1
      %p411 = scmp.lt.s32.totalorder %s28, 0
      %s412 = scalar_select %p411, %s28, 0
      %s413 = sadd.s32 %s412, %s410
      %s414 = smul.addr %s413, 2
      %s415 = scalar_lea.vmem %s10, %s414
      %p416 = pneg %p310
      %p417 = pneg %p307
      %p418 = scmp.lt.s32.totalorder %s27, 1
      %s419 = scalar_select %p418, %s27, 1
      %p420 = scmp.lt.s32.totalorder %s28, 0
      %s421 = scalar_select %p420, %s28, 0
      %s422 = sadd.s32 %s421, %s419
      %s423 = smul.addr %s422, 2
      %s424 = scalar_lea.vmem %s11, %s423
      %p425 = scmp.lt.s32.totalorder %s27, 1
      %s426 = scalar_select %p425, %s27, 1
      %p427 = scmp.lt.s32.totalorder %s28, 0
      %s428 = scalar_select %p427, %s28, 0
      %s429 = smul.addr %s426, 128
      %s430 = sadd.s32 %s428, %s429
      %s431 = smul.addr %s430, 8
      %s432 = scalar_lea.vmem %s0, %s431
      %p433 = scmp.lt.s32.totalorder %s27, 1
      %s434 = scalar_select %p433, %s27, 1
      %p435 = scmp.lt.s32.totalorder %s28, 0
      %s436 = scalar_select %p435, %s28, 0
      %s437 = smul.addr %s434, 2
      %s438 = sadd.s32 %s436, %s437
      %s439 = smul.addr %s438, 8
      %s440 = scalar_lea.vmem %s9, %s439
      %p441 = scmp.lt.s32.totalorder %s27, 1
      %s442 = scalar_select %p441, %s27, 1
      %p443 = scmp.lt.s32.totalorder %s28, 0
      %s444 = scalar_select %p443, %s28, 0
      %s445 = sadd.s32 %s444, %s442
      %s446 = smul.addr %s445, 2
      %s447 = scalar_lea.vmem %s10, %s446
      %p448 = scmp.lt.s32.totalorder %s27, 1
      %s449 = scalar_select %p448, %s27, 1
      %p450 = scmp.lt.s32.totalorder %s28, 0
      %s451 = scalar_select %p450, %s28, 0
      %s452 = sadd.s32 %s451, %s449
      %s453 = smul.addr %s452, 2
      %s454 = scalar_lea.vmem %s11, %s453
      %v455 = vld [vmem:[%s432] sm:$0xff]
      %v456 = vld [vmem:[%s432 + $0x8] sm:$0xff]
      %v457 = vld [vmem:[%s432 + $0x10] sm:$0xff]
      %v458 = vld [vmem:[%s432 + $0x18] sm:$0xff]
      %v459 = vld [vmem:[%s432 + $0x20] sm:$0xff]
      %v460 = vld [vmem:[%s432 + $0x28] sm:$0xff]
      %v461 = vld [vmem:[%s432 + $0x30] sm:$0xff]
      %v462 = vld [vmem:[%s432 + $0x38] sm:$0xff]
      %v463 = vld [vmem:[%s432 + $0x40] sm:$0xff]
      %v464 = vld [vmem:[%s432 + $0x48] sm:$0xff]
      %v465 = vld [vmem:[%s432 + $0x50] sm:$0xff]
      %v466 = vld [vmem:[%s432 + $0x58] sm:$0xff]
      %v467 = vld [vmem:[%s432 + $0x60] sm:$0xff]
      %v468 = vld [vmem:[%s432 + $0x68] sm:$0xff]
      %v469 = vld [vmem:[%s432 + $0x70] sm:$0xff]
      %v470 = vld [vmem:[%s432 + $0x78] sm:$0xff]
      %v471 = vld [vmem:[%s432 + $0x80] sm:$0xff]
      %v472 = vld [vmem:[%s432 + $0x88] sm:$0xff]
      %v473 = vld [vmem:[%s432 + $0x90] sm:$0xff]
      %v474 = vld [vmem:[%s432 + $0x98] sm:$0xff]
      %v475 = vld [vmem:[%s432 + $0xa0] sm:$0xff]
      %v476 = vld [vmem:[%s432 + $0xa8] sm:$0xff]
      %v477 = vld [vmem:[%s432 + $0xb0] sm:$0xff]
      %v478 = vld [vmem:[%s432 + $0xb8] sm:$0xff]
      %v479 = vld [vmem:[%s432 + $0xc0] sm:$0xff]
      %v480 = vld [vmem:[%s432 + $0xc8] sm:$0xff]
      %v481 = vld [vmem:[%s432 + $0xd0] sm:$0xff]
      %v482 = vld [vmem:[%s432 + $0xd8] sm:$0xff]
      %v483 = vld [vmem:[%s432 + $0xe0] sm:$0xff]
      %v484 = vld [vmem:[%s432 + $0xe8] sm:$0xff]
      %v485 = vld [vmem:[%s432 + $0xf0] sm:$0xff]
      %v486 = vld [vmem:[%s432 + $0xf8] sm:$0xff]
      %v487 = vld [vmem:[%s432 + $0x100] sm:$0xff]
      %v488 = vld [vmem:[%s432 + $0x108] sm:$0xff]
      %v489 = vld [vmem:[%s432 + $0x110] sm:$0xff]
      %v490 = vld [vmem:[%s432 + $0x118] sm:$0xff]
      %v491 = vld [vmem:[%s432 + $0x120] sm:$0xff]
      %v492 = vld [vmem:[%s432 + $0x128] sm:$0xff]
      %v493 = vld [vmem:[%s432 + $0x130] sm:$0xff]
      %v494 = vld [vmem:[%s432 + $0x138] sm:$0xff]
      %v495 = vld [vmem:[%s432 + $0x140] sm:$0xff]
      %v496 = vld [vmem:[%s432 + $0x148] sm:$0xff]
      %v497 = vld [vmem:[%s432 + $0x150] sm:$0xff]
      %v498 = vld [vmem:[%s432 + $0x158] sm:$0xff]
      %v499 = vld [vmem:[%s432 + $0x160] sm:$0xff]
      %v500 = vld [vmem:[%s432 + $0x168] sm:$0xff]
      %v501 = vld [vmem:[%s432 + $0x170] sm:$0xff]
      %v502 = vld [vmem:[%s432 + $0x178] sm:$0xff]
      %v503 = vld [vmem:[%s432 + $0x180] sm:$0xff]
      %v504 = vld [vmem:[%s432 + $0x188] sm:$0xff]
      %v505 = vld [vmem:[%s432 + $0x190] sm:$0xff]
      %v506 = vld [vmem:[%s432 + $0x198] sm:$0xff]
      %v507 = vld [vmem:[%s432 + $0x1a0] sm:$0xff]
      %v508 = vld [vmem:[%s432 + $0x1a8] sm:$0xff]
      %v509 = vld [vmem:[%s432 + $0x1b0] sm:$0xff]
      %v510 = vld [vmem:[%s432 + $0x1b8] sm:$0xff]
      %v511 = vld [vmem:[%s432 + $0x1c0] sm:$0xff]
      %v512 = vld [vmem:[%s432 + $0x1c8] sm:$0xff]
      %v513 = vld [vmem:[%s432 + $0x1d0] sm:$0xff]
      %v514 = vld [vmem:[%s432 + $0x1d8] sm:$0xff]
      %v515 = vld [vmem:[%s432 + $0x1e0] sm:$0xff]
      %v516 = vld [vmem:[%s432 + $0x1e8] sm:$0xff]
      %v517 = vld [vmem:[%s432 + $0x1f0] sm:$0xff]
      %v518 = vld [vmem:[%s432 + $0x1f8] sm:$0xff]
      %v519 = vld [vmem:[%s432 + $0x200] sm:$0xff]
      %v520 = vld [vmem:[%s432 + $0x208] sm:$0xff]
      %v521 = vld [vmem:[%s432 + $0x210] sm:$0xff]
      %v522 = vld [vmem:[%s432 + $0x218] sm:$0xff]
      %v523 = vld [vmem:[%s432 + $0x220] sm:$0xff]
      %v524 = vld [vmem:[%s432 + $0x228] sm:$0xff]
      %v525 = vld [vmem:[%s432 + $0x230] sm:$0xff]
      %v526 = vld [vmem:[%s432 + $0x238] sm:$0xff]
      %v527 = vld [vmem:[%s432 + $0x240] sm:$0xff]
      %v528 = vld [vmem:[%s432 + $0x248] sm:$0xff]
      %v529 = vld [vmem:[%s432 + $0x250] sm:$0xff]
      %v530 = vld [vmem:[%s432 + $0x258] sm:$0xff]
      %v531 = vld [vmem:[%s432 + $0x260] sm:$0xff]
      %v532 = vld [vmem:[%s432 + $0x268] sm:$0xff]
      %v533 = vld [vmem:[%s432 + $0x270] sm:$0xff]
      %v534 = vld [vmem:[%s432 + $0x278] sm:$0xff]
      %v535 = vld [vmem:[%s432 + $0x280] sm:$0xff]
      %v536 = vld [vmem:[%s432 + $0x288] sm:$0xff]
      %v537 = vld [vmem:[%s432 + $0x290] sm:$0xff]
      %v538 = vld [vmem:[%s432 + $0x298] sm:$0xff]
      %v539 = vld [vmem:[%s432 + $0x2a0] sm:$0xff]
      %v540 = vld [vmem:[%s432 + $0x2a8] sm:$0xff]
      %v541 = vld [vmem:[%s432 + $0x2b0] sm:$0xff]
      %v542 = vld [vmem:[%s432 + $0x2b8] sm:$0xff]
      %v543 = vld [vmem:[%s432 + $0x2c0] sm:$0xff]
      %v544 = vld [vmem:[%s432 + $0x2c8] sm:$0xff]
      %v545 = vld [vmem:[%s432 + $0x2d0] sm:$0xff]
      %v546 = vld [vmem:[%s432 + $0x2d8] sm:$0xff]
      %v547 = vld [vmem:[%s432 + $0x2e0] sm:$0xff]
      %v548 = vld [vmem:[%s432 + $0x2e8] sm:$0xff]
      %v549 = vld [vmem:[%s432 + $0x2f0] sm:$0xff]
      %v550 = vld [vmem:[%s432 + $0x2f8] sm:$0xff]
      %v551 = vld [vmem:[%s432 + $0x300] sm:$0xff]
      %v552 = vld [vmem:[%s432 + $0x308] sm:$0xff]
      %v553 = vld [vmem:[%s432 + $0x310] sm:$0xff]
      %v554 = vld [vmem:[%s432 + $0x318] sm:$0xff]
      %v555 = vld [vmem:[%s432 + $0x320] sm:$0xff]
      %v556 = vld [vmem:[%s432 + $0x328] sm:$0xff]
      %v557 = vld [vmem:[%s432 + $0x330] sm:$0xff]
      %v558 = vld [vmem:[%s432 + $0x338] sm:$0xff]
      %v559 = vld [vmem:[%s432 + $0x340] sm:$0xff]
      %v560 = vld [vmem:[%s432 + $0x348] sm:$0xff]
      %v561 = vld [vmem:[%s432 + $0x350] sm:$0xff]
      %v562 = vld [vmem:[%s432 + $0x358] sm:$0xff]
      %v563 = vld [vmem:[%s432 + $0x360] sm:$0xff]
      %v564 = vld [vmem:[%s432 + $0x368] sm:$0xff]
      %v565 = vld [vmem:[%s432 + $0x370] sm:$0xff]
      %v566 = vld [vmem:[%s432 + $0x378] sm:$0xff]
      %v567 = vld [vmem:[%s432 + $0x380] sm:$0xff]
      %v568 = vld [vmem:[%s432 + $0x388] sm:$0xff]
      %v569 = vld [vmem:[%s432 + $0x390] sm:$0xff]
      %v570 = vld [vmem:[%s432 + $0x398] sm:$0xff]
      %v571 = vld [vmem:[%s432 + $0x3a0] sm:$0xff]
      %v572 = vld [vmem:[%s432 + $0x3a8] sm:$0xff]
      %v573 = vld [vmem:[%s432 + $0x3b0] sm:$0xff]
      %v574 = vld [vmem:[%s432 + $0x3b8] sm:$0xff]
      %v575 = vld [vmem:[%s432 + $0x3c0] sm:$0xff]
      %v576 = vld [vmem:[%s432 + $0x3c8] sm:$0xff]
      %v577 = vld [vmem:[%s432 + $0x3d0] sm:$0xff]
      %v578 = vld [vmem:[%s432 + $0x3d8] sm:$0xff]
      %v579 = vld [vmem:[%s432 + $0x3e0] sm:$0xff]
      %v580 = vld [vmem:[%s432 + $0x3e8] sm:$0xff]
      %v581 = vld [vmem:[%s432 + $0x3f0] sm:$0xff]
      %v582 = vld [vmem:[%s432 + $0x3f8] sm:$0xff]
      %v583 = vld [vmem:[%s1] sm:$0xff]
      %v584 = vld [vmem:[%s1 + $0x8] sm:$0xff]
      %v585 = vld [vmem:[%s1 + $0x10] sm:$0xff]
      %v586 = vld [vmem:[%s1 + $0x18] sm:$0xff]
      %v587 = vld [vmem:[%s1 + $0x20] sm:$0xff]
      %v588 = vld [vmem:[%s1 + $0x28] sm:$0xff]
      %v589 = vld [vmem:[%s1 + $0x30] sm:$0xff]
      %v590 = vld [vmem:[%s1 + $0x38] sm:$0xff]
      %v591 = vld [vmem:[%s1 + $0x40] sm:$0xff]
      %v592 = vld [vmem:[%s1 + $0x48] sm:$0xff]
      %v593 = vld [vmem:[%s1 + $0x50] sm:$0xff]
      %v594 = vld [vmem:[%s1 + $0x58] sm:$0xff]
      %v595 = vld [vmem:[%s1 + $0x60] sm:$0xff]
      %v596 = vld [vmem:[%s1 + $0x68] sm:$0xff]
      %v597 = vld [vmem:[%s1 + $0x70] sm:$0xff]
      %v598 = vld [vmem:[%s1 + $0x78] sm:$0xff]
      %v599 = vld [vmem:[%s1 + $0x80] sm:$0xff]
      %v600 = vld [vmem:[%s1 + $0x88] sm:$0xff]
      %v601 = vld [vmem:[%s1 + $0x90] sm:$0xff]
      %v602 = vld [vmem:[%s1 + $0x98] sm:$0xff]
      %v603 = vld [vmem:[%s1 + $0xa0] sm:$0xff]
      %v604 = vld [vmem:[%s1 + $0xa8] sm:$0xff]
      %v605 = vld [vmem:[%s1 + $0xb0] sm:$0xff]
      %v606 = vld [vmem:[%s1 + $0xb8] sm:$0xff]
      %v607 = vld [vmem:[%s1 + $0xc0] sm:$0xff]
      %v608 = vld [vmem:[%s1 + $0xc8] sm:$0xff]
      %v609 = vld [vmem:[%s1 + $0xd0] sm:$0xff]
      %v610 = vld [vmem:[%s1 + $0xd8] sm:$0xff]
      %v611 = vld [vmem:[%s1 + $0xe0] sm:$0xff]
      %v612 = vld [vmem:[%s1 + $0xe8] sm:$0xff]
      %v613 = vld [vmem:[%s1 + $0xf0] sm:$0xff]
      %v614 = vld [vmem:[%s1 + $0xf8] sm:$0xff]
      %v615 = vld [vmem:[%s1 + $0x100] sm:$0xff]
      %v616 = vld [vmem:[%s1 + $0x108] sm:$0xff]
      %v617 = vld [vmem:[%s1 + $0x110] sm:$0xff]
      %v618 = vld [vmem:[%s1 + $0x118] sm:$0xff]
      %v619 = vld [vmem:[%s1 + $0x120] sm:$0xff]
      %v620 = vld [vmem:[%s1 + $0x128] sm:$0xff]
      %v621 = vld [vmem:[%s1 + $0x130] sm:$0xff]
      %v622 = vld [vmem:[%s1 + $0x138] sm:$0xff]
      %v623 = vld [vmem:[%s1 + $0x140] sm:$0xff]
      %v624 = vld [vmem:[%s1 + $0x148] sm:$0xff]
      %v625 = vld [vmem:[%s1 + $0x150] sm:$0xff]
      %v626 = vld [vmem:[%s1 + $0x158] sm:$0xff]
      %v627 = vld [vmem:[%s1 + $0x160] sm:$0xff]
      %v628 = vld [vmem:[%s1 + $0x168] sm:$0xff]
      %v629 = vld [vmem:[%s1 + $0x170] sm:$0xff]
      %v630 = vld [vmem:[%s1 + $0x178] sm:$0xff]
      %v631 = vld [vmem:[%s1 + $0x180] sm:$0xff]
      %v632 = vld [vmem:[%s1 + $0x188] sm:$0xff]
      %v633 = vld [vmem:[%s1 + $0x190] sm:$0xff]
      %v634 = vld [vmem:[%s1 + $0x198] sm:$0xff]
      %v635 = vld [vmem:[%s1 + $0x1a0] sm:$0xff]
      %v636 = vld [vmem:[%s1 + $0x1a8] sm:$0xff]
      %v637 = vld [vmem:[%s1 + $0x1b0] sm:$0xff]
      %v638 = vld [vmem:[%s1 + $0x1b8] sm:$0xff]
      %v639 = vld [vmem:[%s1 + $0x1c0] sm:$0xff]
      %v640 = vld [vmem:[%s1 + $0x1c8] sm:$0xff]
      %v641 = vld [vmem:[%s1 + $0x1d0] sm:$0xff]
      %v642 = vld [vmem:[%s1 + $0x1d8] sm:$0xff]
      %v643 = vld [vmem:[%s1 + $0x1e0] sm:$0xff]
      %v644 = vld [vmem:[%s1 + $0x1e8] sm:$0xff]
      %v645 = vld [vmem:[%s1 + $0x1f0] sm:$0xff]
      %v646 = vld [vmem:[%s1 + $0x1f8] sm:$0xff]
      %v647 = vld [vmem:[%s1 + $0x200] sm:$0xff]
      %v648 = vld [vmem:[%s1 + $0x208] sm:$0xff]
      %v649 = vld [vmem:[%s1 + $0x210] sm:$0xff]
      %v650 = vld [vmem:[%s1 + $0x218] sm:$0xff]
      %v651 = vld [vmem:[%s1 + $0x220] sm:$0xff]
      %v652 = vld [vmem:[%s1 + $0x228] sm:$0xff]
      %v653 = vld [vmem:[%s1 + $0x230] sm:$0xff]
      %v654 = vld [vmem:[%s1 + $0x238] sm:$0xff]
      %v655 = vld [vmem:[%s1 + $0x240] sm:$0xff]
      %v656 = vld [vmem:[%s1 + $0x248] sm:$0xff]
      %v657 = vld [vmem:[%s1 + $0x250] sm:$0xff]
      %v658 = vld [vmem:[%s1 + $0x258] sm:$0xff]
      %v659 = vld [vmem:[%s1 + $0x260] sm:$0xff]
      %v660 = vld [vmem:[%s1 + $0x268] sm:$0xff]
      %v661 = vld [vmem:[%s1 + $0x270] sm:$0xff]
      %v662 = vld [vmem:[%s1 + $0x278] sm:$0xff]
      %v663 = vld [vmem:[%s1 + $0x280] sm:$0xff]
      %v664 = vld [vmem:[%s1 + $0x288] sm:$0xff]
      %v665 = vld [vmem:[%s1 + $0x290] sm:$0xff]
      %v666 = vld [vmem:[%s1 + $0x298] sm:$0xff]
      %v667 = vld [vmem:[%s1 + $0x2a0] sm:$0xff]
      %v668 = vld [vmem:[%s1 + $0x2a8] sm:$0xff]
      %v669 = vld [vmem:[%s1 + $0x2b0] sm:$0xff]
      %v670 = vld [vmem:[%s1 + $0x2b8] sm:$0xff]
      %v671 = vld [vmem:[%s1 + $0x2c0] sm:$0xff]
      %v672 = vld [vmem:[%s1 + $0x2c8] sm:$0xff]
      %v673 = vld [vmem:[%s1 + $0x2d0] sm:$0xff]
      %v674 = vld [vmem:[%s1 + $0x2d8] sm:$0xff]
      %v675 = vld [vmem:[%s1 + $0x2e0] sm:$0xff]
      %v676 = vld [vmem:[%s1 + $0x2e8] sm:$0xff]
      %v677 = vld [vmem:[%s1 + $0x2f0] sm:$0xff]
      %v678 = vld [vmem:[%s1 + $0x2f8] sm:$0xff]
      %v679 = vld [vmem:[%s1 + $0x300] sm:$0xff]
      %v680 = vld [vmem:[%s1 + $0x308] sm:$0xff]
      %v681 = vld [vmem:[%s1 + $0x310] sm:$0xff]
      %v682 = vld [vmem:[%s1 + $0x318] sm:$0xff]
      %v683 = vld [vmem:[%s1 + $0x320] sm:$0xff]
      %v684 = vld [vmem:[%s1 + $0x328] sm:$0xff]
      %v685 = vld [vmem:[%s1 + $0x330] sm:$0xff]
      %v686 = vld [vmem:[%s1 + $0x338] sm:$0xff]
      %v687 = vld [vmem:[%s1 + $0x340] sm:$0xff]
      %v688 = vld [vmem:[%s1 + $0x348] sm:$0xff]
      %v689 = vld [vmem:[%s1 + $0x350] sm:$0xff]
      %v690 = vld [vmem:[%s1 + $0x358] sm:$0xff]
      %v691 = vld [vmem:[%s1 + $0x360] sm:$0xff]
      %v692 = vld [vmem:[%s1 + $0x368] sm:$0xff]
      %v693 = vld [vmem:[%s1 + $0x370] sm:$0xff]
      %v694 = vld [vmem:[%s1 + $0x378] sm:$0xff]
      %v695 = vld [vmem:[%s1 + $0x380] sm:$0xff]
      %v696 = vld [vmem:[%s1 + $0x388] sm:$0xff]
      %v697 = vld [vmem:[%s1 + $0x390] sm:$0xff]
      %v698 = vld [vmem:[%s1 + $0x398] sm:$0xff]
      %v699 = vld [vmem:[%s1 + $0x3a0] sm:$0xff]
      %v700 = vld [vmem:[%s1 + $0x3a8] sm:$0xff]
      %v701 = vld [vmem:[%s1 + $0x3b0] sm:$0xff]
      %v702 = vld [vmem:[%s1 + $0x3b8] sm:$0xff]
      %v703 = vld [vmem:[%s1 + $0x3c0] sm:$0xff]
      %v704 = vld [vmem:[%s1 + $0x3c8] sm:$0xff]
      %v705 = vld [vmem:[%s1 + $0x3d0] sm:$0xff]
      %v706 = vld [vmem:[%s1 + $0x3d8] sm:$0xff]
      %v707 = vld [vmem:[%s1 + $0x3e0] sm:$0xff]
      %v708 = vld [vmem:[%s1 + $0x3e8] sm:$0xff]
      %v709 = vld [vmem:[%s1 + $0x3f0] sm:$0xff]
      %v710 = vld [vmem:[%s1 + $0x3f8] sm:$0xff]
      %v711 = vld [vmem:[%s2] sm:$0xff]
      %v712 = vld [vmem:[%s2 + $0x8] sm:$0xff]
      %v713 = vld [vmem:[%s2 + $0x10] sm:$0xff]
      %v714 = vld [vmem:[%s2 + $0x18] sm:$0xff]
      %v715 = vld [vmem:[%s2 + $0x20] sm:$0xff]
      %v716 = vld [vmem:[%s2 + $0x28] sm:$0xff]
      %v717 = vld [vmem:[%s2 + $0x30] sm:$0xff]
      %v718 = vld [vmem:[%s2 + $0x38] sm:$0xff]
      %v719 = vld [vmem:[%s2 + $0x40] sm:$0xff]
      %v720 = vld [vmem:[%s2 + $0x48] sm:$0xff]
      %v721 = vld [vmem:[%s2 + $0x50] sm:$0xff]
      %v722 = vld [vmem:[%s2 + $0x58] sm:$0xff]
      %v723 = vld [vmem:[%s2 + $0x60] sm:$0xff]
      %v724 = vld [vmem:[%s2 + $0x68] sm:$0xff]
      %v725 = vld [vmem:[%s2 + $0x70] sm:$0xff]
      %v726 = vld [vmem:[%s2 + $0x78] sm:$0xff]
      %728 = vset.pattern.permute.xlu0 0
      %729 = vperm.xlu0 %728, %v711
      %v730 = vpop.permute.xlu0 %729
      %733 = vset.pattern.permute.xlu0 0
      %734 = vperm.xlu0 %733, %v712
      %v735 = vpop.permute.xlu0 %734
      %738 = vset.pattern.permute.xlu0 0
      %739 = vperm.xlu0 %738, %v713
      %v740 = vpop.permute.xlu0 %739
      %743 = vset.pattern.permute.xlu0 0
      %744 = vperm.xlu0 %743, %v714
      %v745 = vpop.permute.xlu0 %744
      %748 = vset.pattern.permute.xlu0 0
      %749 = vperm.xlu0 %748, %v715
      %v750 = vpop.permute.xlu0 %749
      %753 = vset.pattern.permute.xlu0 0
      %754 = vperm.xlu0 %753, %v716
      %v755 = vpop.permute.xlu0 %754
      %758 = vset.pattern.permute.xlu0 0
      %759 = vperm.xlu0 %758, %v717
      %v760 = vpop.permute.xlu0 %759
      %763 = vset.pattern.permute.xlu0 0
      %764 = vperm.xlu0 %763, %v718
      %v765 = vpop.permute.xlu0 %764
      %768 = vset.pattern.permute.xlu0 0
      %769 = vperm.xlu0 %768, %v719
      %v770 = vpop.permute.xlu0 %769
      %773 = vset.pattern.permute.xlu0 0
      %774 = vperm.xlu0 %773, %v720
      %v775 = vpop.permute.xlu0 %774
      %778 = vset.pattern.permute.xlu0 0
      %779 = vperm.xlu0 %778, %v721
      %v780 = vpop.permute.xlu0 %779
      %783 = vset.pattern.permute.xlu0 0
      %784 = vperm.xlu0 %783, %v722
      %v785 = vpop.permute.xlu0 %784
      %788 = vset.pattern.permute.xlu0 0
      %789 = vperm.xlu0 %788, %v723
      %v790 = vpop.permute.xlu0 %789
      %793 = vset.pattern.permute.xlu0 0
      %794 = vperm.xlu0 %793, %v724
      %v795 = vpop.permute.xlu0 %794
      %798 = vset.pattern.permute.xlu0 0
      %799 = vperm.xlu0 %798, %v725
      %v800 = vpop.permute.xlu0 %799
      %803 = vset.pattern.permute.xlu0 0
      %804 = vperm.xlu0 %803, %v726
      %v805 = vpop.permute.xlu0 %804
      %807 = vmatprep.subr.mxu0 0.0
      %808 = vmatpush1.msra.mxu0 %v470
      %809 = vmatprep.subr.mxu0 0.0
      %810 = vmatpush1.msra.mxu0 %v469
      %811 = vmatprep.subr.mxu0 0.0
      %812 = vmatpush1.msra.mxu0 %v468
      %813 = vmatprep.subr.mxu0 0.0
      %814 = vmatpush1.msra.mxu0 %v467
      %815 = vmatprep.subr.mxu0 0.0
      %816 = vmatpush1.msra.mxu0 %v466
      %817 = vmatprep.subr.mxu0 0.0
      %818 = vmatpush1.msra.mxu0 %v465
      %819 = vmatprep.subr.mxu0 0.0
      %820 = vmatpush1.msra.mxu0 %v464
      %821 = vmatprep.subr.mxu0 0.0
      %822 = vmatpush1.msra.mxu0 %v463
      %823 = vmatprep.subr.mxu0 0.0
      %824 = vmatpush1.msra.mxu0 %v462
      %825 = vmatprep.subr.mxu0 0.0
      %826 = vmatpush1.msra.mxu0 %v461
      %827 = vmatprep.subr.mxu0 0.0
      %828 = vmatpush1.msra.mxu0 %v460
      %829 = vmatprep.subr.mxu0 0.0
      %830 = vmatpush1.msra.mxu0 %v459
      %831 = vmatprep.subr.mxu0 0.0
      %832 = vmatpush1.msra.mxu0 %v458
      %833 = vmatprep.subr.mxu0 0.0
      %834 = vmatpush1.msra.mxu0 %v457
      %835 = vmatprep.subr.mxu0 0.0
      %836 = vmatpush1.msra.mxu0 %v456
      %837 = vmatprep.subr.mxu0 0.0
      %838 = vmatpush1.msra.mxu0 %v455
      %839 = vmatprep.subr.mxu0 0.0
      %840 = vmatpush2.msra.mxu0 %v486
      %841 = vmatprep.subr.mxu0 0.0
      %842 = vmatpush2.msra.mxu0 %v485
      %843 = vmatprep.subr.mxu0 0.0
      %844 = vmatpush2.msra.mxu0 %v484
      %845 = vmatprep.subr.mxu0 0.0
      %846 = vmatpush2.msra.mxu0 %v483
      %847 = vmatprep.subr.mxu0 0.0
      %848 = vmatpush2.msra.mxu0 %v482
      %849 = vmatprep.subr.mxu0 0.0
      %850 = vmatpush2.msra.mxu0 %v481
      %851 = vmatprep.subr.mxu0 0.0
      %852 = vmatpush2.msra.mxu0 %v480
      %853 = vmatprep.subr.mxu0 0.0
      %854 = vmatpush2.msra.mxu0 %v479
      %855 = vmatprep.subr.mxu0 0.0
      %856 = vmatpush2.msra.mxu0 %v478
      %857 = vmatprep.subr.mxu0 0.0
      %858 = vmatpush2.msra.mxu0 %v477
      %859 = vmatprep.subr.mxu0 0.0
      %860 = vmatpush2.msra.mxu0 %v476
      %861 = vmatprep.subr.mxu0 0.0
      %862 = vmatpush2.msra.mxu0 %v475
      %863 = vmatprep.subr.mxu0 0.0
      %864 = vmatpush2.msra.mxu0 %v474
      %865 = vmatprep.subr.mxu0 0.0
      %866 = vmatpush2.msra.mxu0 %v473
      %867 = vmatprep.subr.mxu0 0.0
      %868 = vmatpush2.msra.mxu0 %v472
      %869 = vmatprep.subr.mxu0 0.0
      %870 = vmatpush2.msra.mxu0 %v471
      %871 = vmatprep.mubr.f32.mxu0 %v584
      %872 = vmatmul.mubr.f32.gmra.mxu0 %v583
      %v873 = vpop.f32.mrf.mxu0
      %v874 = vadd.f32 %v730, %v873
      %v875 = vpop.f32.mrf.mxu0
      %876 = vmatprep.mubr.f32.mxu0 %v592
      %877 = vmatmul.mubr.f32.gmra.mxu0 %v591
      %v878 = vpop.f32.mrf.mxu0
      %v879 = vadd.f32 %v735, %v878
      %v880 = vpop.f32.mrf.mxu0
      %881 = vmatprep.mubr.f32.mxu0 %v600
      %882 = vmatmul.mubr.f32.gmra.mxu0 %v599
      %v883 = vpop.f32.mrf.mxu0
      %v884 = vadd.f32 %v740, %v883
      %v885 = vpop.f32.mrf.mxu0
      %886 = vmatprep.mubr.f32.mxu0 %v608
      %887 = vmatmul.mubr.f32.gmra.mxu0 %v607
      %v888 = vpop.f32.mrf.mxu0
      %v889 = vadd.f32 %v745, %v888
      %v890 = vpop.f32.mrf.mxu0
      %891 = vmatprep.mubr.f32.mxu0 %v616
      %892 = vmatmul.mubr.f32.gmra.mxu0 %v615
      %v893 = vpop.f32.mrf.mxu0
      %v894 = vadd.f32 %v750, %v893
      %v895 = vpop.f32.mrf.mxu0
      %896 = vmatprep.mubr.f32.mxu0 %v624
      %897 = vmatmul.mubr.f32.gmra.mxu0 %v623
      %v898 = vpop.f32.mrf.mxu0
      %v899 = vadd.f32 %v755, %v898
      %v900 = vpop.f32.mrf.mxu0
      %901 = vmatprep.mubr.f32.mxu0 %v632
      %902 = vmatmul.mubr.f32.gmra.mxu0 %v631
      %v903 = vpop.f32.mrf.mxu0
      %v904 = vadd.f32 %v760, %v903
      %v905 = vpop.f32.mrf.mxu0
      %906 = vmatprep.mubr.f32.mxu0 %v640
      %907 = vmatmul.mubr.f32.gmra.mxu0 %v639
      %v908 = vpop.f32.mrf.mxu0
      %v909 = vadd.f32 %v765, %v908
      %v910 = vpop.f32.mrf.mxu0
      %911 = vmatprep.mubr.f32.mxu0 %v648
      %912 = vmatmul.mubr.f32.gmra.mxu0 %v647
      %v913 = vpop.f32.mrf.mxu0
      %v914 = vadd.f32 %v770, %v913
      %v915 = vpop.f32.mrf.mxu0
      %916 = vmatprep.mubr.f32.mxu0 %v656
      %917 = vmatmul.mubr.f32.gmra.mxu0 %v655
      %v918 = vpop.f32.mrf.mxu0
      %v919 = vadd.f32 %v775, %v918
      %v920 = vpop.f32.mrf.mxu0
      %921 = vmatprep.mubr.f32.mxu0 %v664
      %922 = vmatmul.mubr.f32.gmra.mxu0 %v663
      %v923 = vpop.f32.mrf.mxu0
      %v924 = vadd.f32 %v780, %v923
      %v925 = vpop.f32.mrf.mxu0
      %926 = vmatprep.mubr.f32.mxu0 %v672
      %927 = vmatmul.mubr.f32.gmra.mxu0 %v671
      %v928 = vpop.f32.mrf.mxu0
      %v929 = vadd.f32 %v785, %v928
      %v930 = vpop.f32.mrf.mxu0
      %931 = vmatprep.mubr.f32.mxu0 %v680
      %932 = vmatmul.mubr.f32.gmra.mxu0 %v679
      %v933 = vpop.f32.mrf.mxu0
      %v934 = vadd.f32 %v790, %v933
      %v935 = vpop.f32.mrf.mxu0
      %936 = vmatprep.mubr.f32.mxu0 %v688
      %937 = vmatmul.mubr.f32.gmra.mxu0 %v687
      %v938 = vpop.f32.mrf.mxu0
      %v939 = vadd.f32 %v795, %v938
      %v940 = vpop.f32.mrf.mxu0
      %941 = vmatprep.mubr.f32.mxu0 %v696
      %942 = vmatmul.mubr.f32.gmra.mxu0 %v695
      %v943 = vpop.f32.mrf.mxu0
      %v944 = vadd.f32 %v800, %v943
      %v945 = vpop.f32.mrf.mxu0
      %946 = vmatprep.mubr.f32.mxu0 %v704
      %947 = vmatmul.mubr.f32.gmra.mxu0 %v703
      %v948 = vpop.f32.mrf.mxu0
      %v949 = vadd.f32 %v805, %v948
      %v950 = vpop.f32.mrf.mxu0
      %951 = vdwg.mxu0
      %952 = vmatprep.subr.mxu0 0.0
      %953 = vmatpush1.msra.mxu0 %v502
      %954 = vmatprep.subr.mxu0 0.0
      %955 = vmatpush1.msra.mxu0 %v501
      %956 = vmatprep.subr.mxu0 0.0
      %957 = vmatpush1.msra.mxu0 %v500
      %958 = vmatprep.subr.mxu0 0.0
      %959 = vmatpush1.msra.mxu0 %v499
      %960 = vmatprep.subr.mxu0 0.0
      %961 = vmatpush1.msra.mxu0 %v498
      %962 = vmatprep.subr.mxu0 0.0
      %963 = vmatpush1.msra.mxu0 %v497
      %964 = vmatprep.subr.mxu0 0.0
      %965 = vmatpush1.msra.mxu0 %v496
      %966 = vmatprep.subr.mxu0 0.0
      %967 = vmatpush1.msra.mxu0 %v495
      %968 = vmatprep.subr.mxu0 0.0
      %969 = vmatpush1.msra.mxu0 %v494
      %970 = vmatprep.subr.mxu0 0.0
      %971 = vmatpush1.msra.mxu0 %v493
      %972 = vmatprep.subr.mxu0 0.0
      %973 = vmatpush1.msra.mxu0 %v492
      %974 = vmatprep.subr.mxu0 0.0
      %975 = vmatpush1.msra.mxu0 %v491
      %976 = vmatprep.subr.mxu0 0.0
      %977 = vmatpush1.msra.mxu0 %v490
      %978 = vmatprep.subr.mxu0 0.0
      %979 = vmatpush1.msra.mxu0 %v489
      %980 = vmatprep.subr.mxu0 0.0
      %981 = vmatpush1.msra.mxu0 %v488
      %982 = vmatprep.subr.mxu0 0.0
      %983 = vmatpush1.msra.mxu0 %v487
      %984 = vmatprep.subr.mxu0 0.0
      %985 = vmatpush2.msra.mxu0 %v518
      %986 = vmatprep.subr.mxu0 0.0
      %987 = vmatpush2.msra.mxu0 %v517
      %988 = vmatprep.subr.mxu0 0.0
      %989 = vmatpush2.msra.mxu0 %v516
      %990 = vmatprep.subr.mxu0 0.0
      %991 = vmatpush2.msra.mxu0 %v515
      %992 = vmatprep.subr.mxu0 0.0
      %993 = vmatpush2.msra.mxu0 %v514
      %994 = vmatprep.subr.mxu0 0.0
      %995 = vmatpush2.msra.mxu0 %v513
      %996 = vmatprep.subr.mxu0 0.0
      %997 = vmatpush2.msra.mxu0 %v512
      %998 = vmatprep.subr.mxu0 0.0
      %999 = vmatpush2.msra.mxu0 %v511
      %1000 = vmatprep.subr.mxu0 0.0
      %1001 = vmatpush2.msra.mxu0 %v510
      %1002 = vmatprep.subr.mxu0 0.0
      %1003 = vmatpush2.msra.mxu0 %v509
      %1004 = vmatprep.subr.mxu0 0.0
      %1005 = vmatpush2.msra.mxu0 %v508
      %1006 = vmatprep.subr.mxu0 0.0
      %1007 = vmatpush2.msra.mxu0 %v507
      %1008 = vmatprep.subr.mxu0 0.0
      %1009 = vmatpush2.msra.mxu0 %v506
      %1010 = vmatprep.subr.mxu0 0.0
      %1011 = vmatpush2.msra.mxu0 %v505
      %1012 = vmatprep.subr.mxu0 0.0
      %1013 = vmatpush2.msra.mxu0 %v504
      %1014 = vmatprep.subr.mxu0 0.0
      %1015 = vmatpush2.msra.mxu0 %v503
      %1016 = vmatprep.mubr.f32.mxu0 %v586
      %1017 = vmatmul.mubr.f32.gmra.mxu0 %v585
      %v1018 = vpop.f32.mrf.mxu0
      %v1019 = vadd.f32 %v874, %v1018
      %v1020 = vpop.f32.mrf.mxu0
      %1021 = vmatprep.mubr.f32.mxu0 %v594
      %1022 = vmatmul.mubr.f32.gmra.mxu0 %v593
      %v1023 = vpop.f32.mrf.mxu0
      %v1024 = vadd.f32 %v879, %v1023
      %v1025 = vpop.f32.mrf.mxu0
      %1026 = vmatprep.mubr.f32.mxu0 %v602
      %1027 = vmatmul.mubr.f32.gmra.mxu0 %v601
      %v1028 = vpop.f32.mrf.mxu0
      %v1029 = vadd.f32 %v884, %v1028
      %v1030 = vpop.f32.mrf.mxu0
      %1031 = vmatprep.mubr.f32.mxu0 %v610
      %1032 = vmatmul.mubr.f32.gmra.mxu0 %v609
      %v1033 = vpop.f32.mrf.mxu0
      %v1034 = vadd.f32 %v889, %v1033
      %v1035 = vpop.f32.mrf.mxu0
      %1036 = vmatprep.mubr.f32.mxu0 %v618
      %1037 = vmatmul.mubr.f32.gmra.mxu0 %v617
      %v1038 = vpop.f32.mrf.mxu0
      %v1039 = vadd.f32 %v894, %v1038
      %v1040 = vpop.f32.mrf.mxu0
      %1041 = vmatprep.mubr.f32.mxu0 %v626
      %1042 = vmatmul.mubr.f32.gmra.mxu0 %v625
      %v1043 = vpop.f32.mrf.mxu0
      %v1044 = vadd.f32 %v899, %v1043
      %v1045 = vpop.f32.mrf.mxu0
      %1046 = vmatprep.mubr.f32.mxu0 %v634
      %1047 = vmatmul.mubr.f32.gmra.mxu0 %v633
      %v1048 = vpop.f32.mrf.mxu0
      %v1049 = vadd.f32 %v904, %v1048
      %v1050 = vpop.f32.mrf.mxu0
      %1051 = vmatprep.mubr.f32.mxu0 %v642
      %1052 = vmatmul.mubr.f32.gmra.mxu0 %v641
      %v1053 = vpop.f32.mrf.mxu0
      %v1054 = vadd.f32 %v909, %v1053
      %v1055 = vpop.f32.mrf.mxu0
      %1056 = vmatprep.mubr.f32.mxu0 %v650
      %1057 = vmatmul.mubr.f32.gmra.mxu0 %v649
      %v1058 = vpop.f32.mrf.mxu0
      %v1059 = vadd.f32 %v914, %v1058
      %v1060 = vpop.f32.mrf.mxu0
      %1061 = vmatprep.mubr.f32.mxu0 %v658
      %1062 = vmatmul.mubr.f32.gmra.mxu0 %v657
      %v1063 = vpop.f32.mrf.mxu0
      %v1064 = vadd.f32 %v919, %v1063
      %v1065 = vpop.f32.mrf.mxu0
      %1066 = vmatprep.mubr.f32.mxu0 %v666
      %1067 = vmatmul.mubr.f32.gmra.mxu0 %v665
      %v1068 = vpop.f32.mrf.mxu0
      %v1069 = vadd.f32 %v924, %v1068
      %v1070 = vpop.f32.mrf.mxu0
      %1071 = vmatprep.mubr.f32.mxu0 %v674
      %1072 = vmatmul.mubr.f32.gmra.mxu0 %v673
      %v1073 = vpop.f32.mrf.mxu0
      %v1074 = vadd.f32 %v929, %v1073
      %v1075 = vpop.f32.mrf.mxu0
      %1076 = vmatprep.mubr.f32.mxu0 %v682
      %1077 = vmatmul.mubr.f32.gmra.mxu0 %v681
      %v1078 = vpop.f32.mrf.mxu0
      %v1079 = vadd.f32 %v934, %v1078
      %v1080 = vpop.f32.mrf.mxu0
      %1081 = vmatprep.mubr.f32.mxu0 %v690
      %1082 = vmatmul.mubr.f32.gmra.mxu0 %v689
      %v1083 = vpop.f32.mrf.mxu0
      %v1084 = vadd.f32 %v939, %v1083
      %v1085 = vpop.f32.mrf.mxu0
      %1086 = vmatprep.mubr.f32.mxu0 %v698
      %1087 = vmatmul.mubr.f32.gmra.mxu0 %v697
      %v1088 = vpop.f32.mrf.mxu0
      %v1089 = vadd.f32 %v944, %v1088
      %v1090 = vpop.f32.mrf.mxu0
      %1091 = vmatprep.mubr.f32.mxu0 %v706
      %1092 = vmatmul.mubr.f32.gmra.mxu0 %v705
      %v1093 = vpop.f32.mrf.mxu0
      %v1094 = vadd.f32 %v949, %v1093
      %v1095 = vpop.f32.mrf.mxu0
      %1096 = vdwg.mxu0
      %1097 = vmatprep.subr.mxu0 0.0
      %1098 = vmatpush1.msra.mxu0 %v534
      %1099 = vmatprep.subr.mxu0 0.0
      %1100 = vmatpush1.msra.mxu0 %v533
      %1101 = vmatprep.subr.mxu0 0.0
      %1102 = vmatpush1.msra.mxu0 %v532
      %1103 = vmatprep.subr.mxu0 0.0
      %1104 = vmatpush1.msra.mxu0 %v531
      %1105 = vmatprep.subr.mxu0 0.0
      %1106 = vmatpush1.msra.mxu0 %v530
      %1107 = vmatprep.subr.mxu0 0.0
      %1108 = vmatpush1.msra.mxu0 %v529
      %1109 = vmatprep.subr.mxu0 0.0
      %1110 = vmatpush1.msra.mxu0 %v528
      %1111 = vmatprep.subr.mxu0 0.0
      %1112 = vmatpush1.msra.mxu0 %v527
      %1113 = vmatprep.subr.mxu0 0.0
      %1114 = vmatpush1.msra.mxu0 %v526
      %1115 = vmatprep.subr.mxu0 0.0
      %1116 = vmatpush1.msra.mxu0 %v525
      %1117 = vmatprep.subr.mxu0 0.0
      %1118 = vmatpush1.msra.mxu0 %v524
      %1119 = vmatprep.subr.mxu0 0.0
      %1120 = vmatpush1.msra.mxu0 %v523
      %1121 = vmatprep.subr.mxu0 0.0
      %1122 = vmatpush1.msra.mxu0 %v522
      %1123 = vmatprep.subr.mxu0 0.0
      %1124 = vmatpush1.msra.mxu0 %v521
      %1125 = vmatprep.subr.mxu0 0.0
      %1126 = vmatpush1.msra.mxu0 %v520
      %1127 = vmatprep.subr.mxu0 0.0
      %1128 = vmatpush1.msra.mxu0 %v519
      %1129 = vmatprep.subr.mxu0 0.0
      %1130 = vmatpush2.msra.mxu0 %v550
      %1131 = vmatprep.subr.mxu0 0.0
      %1132 = vmatpush2.msra.mxu0 %v549
      %1133 = vmatprep.subr.mxu0 0.0
      %1134 = vmatpush2.msra.mxu0 %v548
      %1135 = vmatprep.subr.mxu0 0.0
      %1136 = vmatpush2.msra.mxu0 %v547
      %1137 = vmatprep.subr.mxu0 0.0
      %1138 = vmatpush2.msra.mxu0 %v546
      %1139 = vmatprep.subr.mxu0 0.0
      %1140 = vmatpush2.msra.mxu0 %v545
      %1141 = vmatprep.subr.mxu0 0.0
      %1142 = vmatpush2.msra.mxu0 %v544
      %1143 = vmatprep.subr.mxu0 0.0
      %1144 = vmatpush2.msra.mxu0 %v543
      %1145 = vmatprep.subr.mxu0 0.0
      %1146 = vmatpush2.msra.mxu0 %v542
      %1147 = vmatprep.subr.mxu0 0.0
      %1148 = vmatpush2.msra.mxu0 %v541
      %1149 = vmatprep.subr.mxu0 0.0
      %1150 = vmatpush2.msra.mxu0 %v540
      %1151 = vmatprep.subr.mxu0 0.0
      %1152 = vmatpush2.msra.mxu0 %v539
      %1153 = vmatprep.subr.mxu0 0.0
      %1154 = vmatpush2.msra.mxu0 %v538
      %1155 = vmatprep.subr.mxu0 0.0
      %1156 = vmatpush2.msra.mxu0 %v537
      %1157 = vmatprep.subr.mxu0 0.0
      %1158 = vmatpush2.msra.mxu0 %v536
      %1159 = vmatprep.subr.mxu0 0.0
      %1160 = vmatpush2.msra.mxu0 %v535
      %1161 = vmatprep.mubr.f32.mxu0 %v588
      %1162 = vmatmul.mubr.f32.gmra.mxu0 %v587
      %v1163 = vpop.f32.mrf.mxu0
      %v1164 = vadd.f32 %v1019, %v1163
      %v1165 = vpop.f32.mrf.mxu0
      %1166 = vmatprep.mubr.f32.mxu0 %v596
      %1167 = vmatmul.mubr.f32.gmra.mxu0 %v595
      %v1168 = vpop.f32.mrf.mxu0
      %v1169 = vadd.f32 %v1024, %v1168
      %v1170 = vpop.f32.mrf.mxu0
      %1171 = vmatprep.mubr.f32.mxu0 %v604
      %1172 = vmatmul.mubr.f32.gmra.mxu0 %v603
      %v1173 = vpop.f32.mrf.mxu0
      %v1174 = vadd.f32 %v1029, %v1173
      %v1175 = vpop.f32.mrf.mxu0
      %1176 = vmatprep.mubr.f32.mxu0 %v612
      %1177 = vmatmul.mubr.f32.gmra.mxu0 %v611
      %v1178 = vpop.f32.mrf.mxu0
      %v1179 = vadd.f32 %v1034, %v1178
      %v1180 = vpop.f32.mrf.mxu0
      %1181 = vmatprep.mubr.f32.mxu0 %v620
      %1182 = vmatmul.mubr.f32.gmra.mxu0 %v619
      %v1183 = vpop.f32.mrf.mxu0
      %v1184 = vadd.f32 %v1039, %v1183
      %v1185 = vpop.f32.mrf.mxu0
      %1186 = vmatprep.mubr.f32.mxu0 %v628
      %1187 = vmatmul.mubr.f32.gmra.mxu0 %v627
      %v1188 = vpop.f32.mrf.mxu0
      %v1189 = vadd.f32 %v1044, %v1188
      %v1190 = vpop.f32.mrf.mxu0
      %1191 = vmatprep.mubr.f32.mxu0 %v636
      %1192 = vmatmul.mubr.f32.gmra.mxu0 %v635
      %v1193 = vpop.f32.mrf.mxu0
      %v1194 = vadd.f32 %v1049, %v1193
      %v1195 = vpop.f32.mrf.mxu0
      %1196 = vmatprep.mubr.f32.mxu0 %v644
      %1197 = vmatmul.mubr.f32.gmra.mxu0 %v643
      %v1198 = vpop.f32.mrf.mxu0
      %v1199 = vadd.f32 %v1054, %v1198
      %v1200 = vpop.f32.mrf.mxu0
      %1201 = vmatprep.mubr.f32.mxu0 %v652
      %1202 = vmatmul.mubr.f32.gmra.mxu0 %v651
      %v1203 = vpop.f32.mrf.mxu0
      %v1204 = vadd.f32 %v1059, %v1203
      %v1205 = vpop.f32.mrf.mxu0
      %1206 = vmatprep.mubr.f32.mxu0 %v660
      %1207 = vmatmul.mubr.f32.gmra.mxu0 %v659
      %v1208 = vpop.f32.mrf.mxu0
      %v1209 = vadd.f32 %v1064, %v1208
      %v1210 = vpop.f32.mrf.mxu0
      %1211 = vmatprep.mubr.f32.mxu0 %v668
      %1212 = vmatmul.mubr.f32.gmra.mxu0 %v667
      %v1213 = vpop.f32.mrf.mxu0
      %v1214 = vadd.f32 %v1069, %v1213
      %v1215 = vpop.f32.mrf.mxu0
      %1216 = vmatprep.mubr.f32.mxu0 %v676
      %1217 = vmatmul.mubr.f32.gmra.mxu0 %v675
      %v1218 = vpop.f32.mrf.mxu0
      %v1219 = vadd.f32 %v1074, %v1218
      %v1220 = vpop.f32.mrf.mxu0
      %1221 = vmatprep.mubr.f32.mxu0 %v684
      %1222 = vmatmul.mubr.f32.gmra.mxu0 %v683
      %v1223 = vpop.f32.mrf.mxu0
      %v1224 = vadd.f32 %v1079, %v1223
      %v1225 = vpop.f32.mrf.mxu0
      %1226 = vmatprep.mubr.f32.mxu0 %v692
      %1227 = vmatmul.mubr.f32.gmra.mxu0 %v691
      %v1228 = vpop.f32.mrf.mxu0
      %v1229 = vadd.f32 %v1084, %v1228
      %v1230 = vpop.f32.mrf.mxu0
      %1231 = vmatprep.mubr.f32.mxu0 %v700
      %1232 = vmatmul.mubr.f32.gmra.mxu0 %v699
      %v1233 = vpop.f32.mrf.mxu0
      %v1234 = vadd.f32 %v1089, %v1233
      %v1235 = vpop.f32.mrf.mxu0
      %1236 = vmatprep.mubr.f32.mxu0 %v708
      %1237 = vmatmul.mubr.f32.gmra.mxu0 %v707
      %v1238 = vpop.f32.mrf.mxu0
      %v1239 = vadd.f32 %v1094, %v1238
      %v1240 = vpop.f32.mrf.mxu0
      %1241 = vdwg.mxu0
      %1242 = vmatprep.subr.mxu0 0.0
      %1243 = vmatpush1.msra.mxu0 %v566
      %1244 = vmatprep.subr.mxu0 0.0
      %1245 = vmatpush1.msra.mxu0 %v565
      %1246 = vmatprep.subr.mxu0 0.0
      %1247 = vmatpush1.msra.mxu0 %v564
      %1248 = vmatprep.subr.mxu0 0.0
      %1249 = vmatpush1.msra.mxu0 %v563
      %1250 = vmatprep.subr.mxu0 0.0
      %1251 = vmatpush1.msra.mxu0 %v562
      %1252 = vmatprep.subr.mxu0 0.0
      %1253 = vmatpush1.msra.mxu0 %v561
      %1254 = vmatprep.subr.mxu0 0.0
      %1255 = vmatpush1.msra.mxu0 %v560
      %1256 = vmatprep.subr.mxu0 0.0
      %1257 = vmatpush1.msra.mxu0 %v559
      %1258 = vmatprep.subr.mxu0 0.0
      %1259 = vmatpush1.msra.mxu0 %v558
      %1260 = vmatprep.subr.mxu0 0.0
      %1261 = vmatpush1.msra.mxu0 %v557
      %1262 = vmatprep.subr.mxu0 0.0
      %1263 = vmatpush1.msra.mxu0 %v556
      %1264 = vmatprep.subr.mxu0 0.0
      %1265 = vmatpush1.msra.mxu0 %v555
      %1266 = vmatprep.subr.mxu0 0.0
      %1267 = vmatpush1.msra.mxu0 %v554
      %1268 = vmatprep.subr.mxu0 0.0
      %1269 = vmatpush1.msra.mxu0 %v553
      %1270 = vmatprep.subr.mxu0 0.0
      %1271 = vmatpush1.msra.mxu0 %v552
      %1272 = vmatprep.subr.mxu0 0.0
      %1273 = vmatpush1.msra.mxu0 %v551
      %1274 = vmatprep.subr.mxu0 0.0
      %1275 = vmatpush2.msra.mxu0 %v582
      %1276 = vmatprep.subr.mxu0 0.0
      %1277 = vmatpush2.msra.mxu0 %v581
      %1278 = vmatprep.subr.mxu0 0.0
      %1279 = vmatpush2.msra.mxu0 %v580
      %1280 = vmatprep.subr.mxu0 0.0
      %1281 = vmatpush2.msra.mxu0 %v579
      %1282 = vmatprep.subr.mxu0 0.0
      %1283 = vmatpush2.msra.mxu0 %v578
      %1284 = vmatprep.subr.mxu0 0.0
      %1285 = vmatpush2.msra.mxu0 %v577
      %1286 = vmatprep.subr.mxu0 0.0
      %1287 = vmatpush2.msra.mxu0 %v576
      %1288 = vmatprep.subr.mxu0 0.0
      %1289 = vmatpush2.msra.mxu0 %v575
      %1290 = vmatprep.subr.mxu0 0.0
      %1291 = vmatpush2.msra.mxu0 %v574
      %1292 = vmatprep.subr.mxu0 0.0
      %1293 = vmatpush2.msra.mxu0 %v573
      %1294 = vmatprep.subr.mxu0 0.0
      %1295 = vmatpush2.msra.mxu0 %v572
      %1296 = vmatprep.subr.mxu0 0.0
      %1297 = vmatpush2.msra.mxu0 %v571
      %1298 = vmatprep.subr.mxu0 0.0
      %1299 = vmatpush2.msra.mxu0 %v570
      %1300 = vmatprep.subr.mxu0 0.0
      %1301 = vmatpush2.msra.mxu0 %v569
      %1302 = vmatprep.subr.mxu0 0.0
      %1303 = vmatpush2.msra.mxu0 %v568
      %1304 = vmatprep.subr.mxu0 0.0
      %1305 = vmatpush2.msra.mxu0 %v567
      %1306 = vmatprep.mubr.f32.mxu0 %v590
      %1307 = vmatmul.mubr.f32.gmra.mxu0 %v589
      %v1308 = vpop.f32.mrf.mxu0
      %v1309 = vadd.f32 %v1164, %v1308
      %v1310 = vpop.f32.mrf.mxu0
      %1311 = vmatprep.mubr.f32.mxu0 %v598
      %1312 = vmatmul.mubr.f32.gmra.mxu0 %v597
      %v1313 = vpop.f32.mrf.mxu0
      %v1314 = vadd.f32 %v1169, %v1313
      %v1315 = vpop.f32.mrf.mxu0
      %1316 = vmatprep.mubr.f32.mxu0 %v606
      %1317 = vmatmul.mubr.f32.gmra.mxu0 %v605
      %v1318 = vpop.f32.mrf.mxu0
      %v1319 = vadd.f32 %v1174, %v1318
      %v1320 = vpop.f32.mrf.mxu0
      %1321 = vmatprep.mubr.f32.mxu0 %v614
      %1322 = vmatmul.mubr.f32.gmra.mxu0 %v613
      %v1323 = vpop.f32.mrf.mxu0
      %v1324 = vadd.f32 %v1179, %v1323
      %v1325 = vpop.f32.mrf.mxu0
      %1326 = vmatprep.mubr.f32.mxu0 %v622
      %1327 = vmatmul.mubr.f32.gmra.mxu0 %v621
      %v1328 = vpop.f32.mrf.mxu0
      %v1329 = vadd.f32 %v1184, %v1328
      %v1330 = vpop.f32.mrf.mxu0
      %1331 = vmatprep.mubr.f32.mxu0 %v630
      %1332 = vmatmul.mubr.f32.gmra.mxu0 %v629
      %v1333 = vpop.f32.mrf.mxu0
      %v1334 = vadd.f32 %v1189, %v1333
      %v1335 = vpop.f32.mrf.mxu0
      %1336 = vmatprep.mubr.f32.mxu0 %v638
      %1337 = vmatmul.mubr.f32.gmra.mxu0 %v637
      %v1338 = vpop.f32.mrf.mxu0
      %v1339 = vadd.f32 %v1194, %v1338
      %v1340 = vpop.f32.mrf.mxu0
      %1341 = vmatprep.mubr.f32.mxu0 %v646
      %1342 = vmatmul.mubr.f32.gmra.mxu0 %v645
      %v1343 = vpop.f32.mrf.mxu0
      %v1344 = vadd.f32 %v1199, %v1343
      %v1345 = vpop.f32.mrf.mxu0
      %1346 = vmatprep.mubr.f32.mxu0 %v654
      %1347 = vmatmul.mubr.f32.gmra.mxu0 %v653
      %v1348 = vpop.f32.mrf.mxu0
      %v1349 = vadd.f32 %v1204, %v1348
      %v1350 = vpop.f32.mrf.mxu0
      %1351 = vmatprep.mubr.f32.mxu0 %v662
      %1352 = vmatmul.mubr.f32.gmra.mxu0 %v661
      %v1353 = vpop.f32.mrf.mxu0
      %v1354 = vadd.f32 %v1209, %v1353
      %v1355 = vpop.f32.mrf.mxu0
      %1356 = vmatprep.mubr.f32.mxu0 %v670
      %1357 = vmatmul.mubr.f32.gmra.mxu0 %v669
      %v1358 = vpop.f32.mrf.mxu0
      %v1359 = vadd.f32 %v1214, %v1358
      %v1360 = vpop.f32.mrf.mxu0
      %1361 = vmatprep.mubr.f32.mxu0 %v678
      %1362 = vmatmul.mubr.f32.gmra.mxu0 %v677
      %v1363 = vpop.f32.mrf.mxu0
      %v1364 = vadd.f32 %v1219, %v1363
      %v1365 = vpop.f32.mrf.mxu0
      %1366 = vmatprep.mubr.f32.mxu0 %v686
      %1367 = vmatmul.mubr.f32.gmra.mxu0 %v685
      %v1368 = vpop.f32.mrf.mxu0
      %v1369 = vadd.f32 %v1224, %v1368
      %v1370 = vpop.f32.mrf.mxu0
      %1371 = vmatprep.mubr.f32.mxu0 %v694
      %1372 = vmatmul.mubr.f32.gmra.mxu0 %v693
      %v1373 = vpop.f32.mrf.mxu0
      %v1374 = vadd.f32 %v1229, %v1373
      %v1375 = vpop.f32.mrf.mxu0
      %1376 = vmatprep.mubr.f32.mxu0 %v702
      %1377 = vmatmul.mubr.f32.gmra.mxu0 %v701
      %v1378 = vpop.f32.mrf.mxu0
      %v1379 = vadd.f32 %v1234, %v1378
      %v1380 = vpop.f32.mrf.mxu0
      %1381 = vmatprep.mubr.f32.mxu0 %v710
      %1382 = vmatmul.mubr.f32.gmra.mxu0 %v709
      %v1383 = vpop.f32.mrf.mxu0
      %v1384 = vadd.f32 %v1239, %v1383
      %v1385 = vpop.f32.mrf.mxu0
      %1386 = vdwg.mxu0
      %vm1387 = vcmp.gt.f32.partialorder %v1309, 0.0
      %vm1388 = vcmp.gt.f32.partialorder %v1314, 0.0
      %vm1389 = vcmp.gt.f32.partialorder %v1319, 0.0
      %vm1390 = vcmp.gt.f32.partialorder %v1324, 0.0
      %vm1391 = vcmp.gt.f32.partialorder %v1329, 0.0
      %vm1392 = vcmp.gt.f32.partialorder %v1334, 0.0
      %vm1393 = vcmp.gt.f32.partialorder %v1339, 0.0
      %vm1394 = vcmp.gt.f32.partialorder %v1344, 0.0
      %vm1395 = vcmp.gt.f32.partialorder %v1349, 0.0
      %vm1396 = vcmp.gt.f32.partialorder %v1354, 0.0
      %vm1397 = vcmp.gt.f32.partialorder %v1359, 0.0
      %vm1398 = vcmp.gt.f32.partialorder %v1364, 0.0
      %vm1399 = vcmp.gt.f32.partialorder %v1369, 0.0
      %vm1400 = vcmp.gt.f32.partialorder %v1374, 0.0
      %vm1401 = vcmp.gt.f32.partialorder %v1379, 0.0
      %vm1402 = vcmp.gt.f32.partialorder %v1384, 0.0
      %v1403 = vmul.f32 %v1309, 0.1
      %v1404 = vmul.f32 %v1314, 0.1
      %v1405 = vmul.f32 %v1319, 0.1
      %v1406 = vmul.f32 %v1324, 0.1
      %v1407 = vmul.f32 %v1329, 0.1
      %v1408 = vmul.f32 %v1334, 0.1
      %v1409 = vmul.f32 %v1339, 0.1
      %v1410 = vmul.f32 %v1344, 0.1
      %v1411 = vmul.f32 %v1349, 0.1
      %v1412 = vmul.f32 %v1354, 0.1
      %v1413 = vmul.f32 %v1359, 0.1
      %v1414 = vmul.f32 %v1364, 0.1
      %v1415 = vmul.f32 %v1369, 0.1
      %v1416 = vmul.f32 %v1374, 0.1
      %v1417 = vmul.f32 %v1379, 0.1
      %v1418 = vmul.f32 %v1384, 0.1
      %v1419 = vsel %vm1387, %v1309, %v1403
      %v1420 = vsel %vm1388, %v1314, %v1404
      %v1421 = vsel %vm1389, %v1319, %v1405
      %v1422 = vsel %vm1390, %v1324, %v1406
      %v1423 = vsel %vm1391, %v1329, %v1407
      %v1424 = vsel %vm1392, %v1334, %v1408
      %v1425 = vsel %vm1393, %v1339, %v1409
      %v1426 = vsel %vm1394, %v1344, %v1410
      %v1427 = vsel %vm1395, %v1349, %v1411
      %v1428 = vsel %vm1396, %v1354, %v1412
      %v1429 = vsel %vm1397, %v1359, %v1413
      %v1430 = vsel %vm1398, %v1364, %v1414
      %v1431 = vsel %vm1399, %v1369, %v1415
      %v1432 = vsel %vm1400, %v1374, %v1416
      %v1433 = vsel %vm1401, %v1379, %v1417
      %v1434 = vsel %vm1402, %v1384, %v1418
      %v1435 = vld [vmem:[%s3] sm:$0xff]
      %v1436 = vld [vmem:[%s3 + $0x8] sm:$0x3]
      %v1437 = vld [vmem:[%s4] sm:$0xff]
      %v1438 = vld [vmem:[%s4 + $0x8] sm:$0x3]
      %1440 = vset.pattern.permute.xlu0 0
      %1441 = vperm.xlu0 %1440, %v1437
      %v1442 = vpop.permute.xlu0 %1441
      %1445 = vset.pattern.permute.xlu0 0
      %1446 = vperm.xlu0 %1445, %v1438
      %v1447 = vpop.permute.xlu0 %1446
      %1449 = vmatprep.subr.mxu0 0.0
      %1450 = vmatpush1.msra.mxu0 %v1434
      %1451 = vmatprep.subr.mxu0 0.0
      %1452 = vmatpush1.msra.mxu0 %v1433
      %1453 = vmatprep.subr.mxu0 0.0
      %1454 = vmatpush1.msra.mxu0 %v1432
      %1455 = vmatprep.subr.mxu0 0.0
      %1456 = vmatpush1.msra.mxu0 %v1431
      %1457 = vmatprep.subr.mxu0 0.0
      %1458 = vmatpush1.msra.mxu0 %v1430
      %1459 = vmatprep.subr.mxu0 0.0
      %1460 = vmatpush1.msra.mxu0 %v1429
      %1461 = vmatprep.subr.mxu0 0.0
      %1462 = vmatpush1.msra.mxu0 %v1428
      %1463 = vmatprep.subr.mxu0 0.0
      %1464 = vmatpush1.msra.mxu0 %v1427
      %1465 = vmatprep.subr.mxu0 0.0
      %1466 = vmatpush1.msra.mxu0 %v1426
      %1467 = vmatprep.subr.mxu0 0.0
      %1468 = vmatpush1.msra.mxu0 %v1425
      %1469 = vmatprep.subr.mxu0 0.0
      %1470 = vmatpush1.msra.mxu0 %v1424
      %1471 = vmatprep.subr.mxu0 0.0
      %1472 = vmatpush1.msra.mxu0 %v1423
      %1473 = vmatprep.subr.mxu0 0.0
      %1474 = vmatpush1.msra.mxu0 %v1422
      %1475 = vmatprep.subr.mxu0 0.0
      %1476 = vmatpush1.msra.mxu0 %v1421
      %1477 = vmatprep.subr.mxu0 0.0
      %1478 = vmatpush1.msra.mxu0 %v1420
      %1479 = vmatprep.subr.mxu0 0.0
      %1480 = vmatpush1.msra.mxu0 %v1419
      %1481 = vmatprep.subr.mxu0 0.0
      %1482 = vmatpush2.msra.mxu0 0.0
      %1483 = vmatprep.subr.mxu0 0.0
      %1484 = vmatpush2.msra.mxu0 0.0
      %1485 = vmatprep.subr.mxu0 0.0
      %1486 = vmatpush2.msra.mxu0 0.0
      %1487 = vmatprep.subr.mxu0 0.0
      %1488 = vmatpush2.msra.mxu0 0.0
      %1489 = vmatprep.subr.mxu0 0.0
      %1490 = vmatpush2.msra.mxu0 0.0
      %1491 = vmatprep.subr.mxu0 0.0
      %1492 = vmatpush2.msra.mxu0 0.0
      %1493 = vmatprep.subr.mxu0 0.0
      %1494 = vmatpush2.msra.mxu0 0.0
      %1495 = vmatprep.subr.mxu0 0.0
      %1496 = vmatpush2.msra.mxu0 0.0
      %1497 = vmatprep.subr.mxu0 0.0
      %1498 = vmatpush2.msra.mxu0 0.0
      %1499 = vmatprep.subr.mxu0 0.0
      %1500 = vmatpush2.msra.mxu0 0.0
      %1501 = vmatprep.subr.mxu0 0.0
      %1502 = vmatpush2.msra.mxu0 0.0
      %1503 = vmatprep.subr.mxu0 0.0
      %1504 = vmatpush2.msra.mxu0 0.0
      %1505 = vmatprep.subr.mxu0 0.0
      %1506 = vmatpush2.msra.mxu0 0.0
      %1507 = vmatprep.subr.mxu0 0.0
      %1508 = vmatpush2.msra.mxu0 0.0
      %1509 = vmatprep.subr.mxu0 0.0
      %1510 = vmatpush2.msra.mxu0 0.0
      %1511 = vmatprep.subr.mxu0 0.0
      %1512 = vmatpush2.msra.mxu0 0.0
      %1513 = vmatprep.mubr.f32.mxu0 0.0
      %1514 = vmatmul.mubr.f32.gmra.mxu0 %v1435
      %v1515 = vpop.f32.mrf.mxu0
      %v1516 = vadd.f32 %v1442, %v1515
      %v1517 = vpop.f32.mrf.mxu0
      %1518 = vmatprep.mubr.f32.mxu0 0.0
      %1519 = vmatmul.mubr.f32.gmra.mxu0 %v1436
      %v1520 = vpop.f32.mrf.mxu0
      %v1521 = vadd.f32 %v1447, %v1520
      %v1522 = vpop.f32.mrf.mxu0
      %1523 = vdwg.mxu0
      %v1524 = vld [vmem:[%s5] sm:$0x3]
      %v1525 = vld [vmem:[%s6] sm:$0x3]
      %1527 = vset.pattern.permute.xlu0 0
      %1528 = vperm.xlu0 %1527, %v1525
      %v1529 = vpop.permute.xlu0 %1528
      %1531 = vmatprep.subr.mxu0 0.0
      %1532 = vmatpush1.msra.mxu0 %v1434
      %1533 = vmatprep.subr.mxu0 0.0
      %1534 = vmatpush1.msra.mxu0 %v1433
      %1535 = vmatprep.subr.mxu0 0.0
      %1536 = vmatpush1.msra.mxu0 %v1432
      %1537 = vmatprep.subr.mxu0 0.0
      %1538 = vmatpush1.msra.mxu0 %v1431
      %1539 = vmatprep.subr.mxu0 0.0
      %1540 = vmatpush1.msra.mxu0 %v1430
      %1541 = vmatprep.subr.mxu0 0.0
      %1542 = vmatpush1.msra.mxu0 %v1429
      %1543 = vmatprep.subr.mxu0 0.0
      %1544 = vmatpush1.msra.mxu0 %v1428
      %1545 = vmatprep.subr.mxu0 0.0
      %1546 = vmatpush1.msra.mxu0 %v1427
      %1547 = vmatprep.subr.mxu0 0.0
      %1548 = vmatpush1.msra.mxu0 %v1426
      %1549 = vmatprep.subr.mxu0 0.0
      %1550 = vmatpush1.msra.mxu0 %v1425
      %1551 = vmatprep.subr.mxu0 0.0
      %1552 = vmatpush1.msra.mxu0 %v1424
      %1553 = vmatprep.subr.mxu0 0.0
      %1554 = vmatpush1.msra.mxu0 %v1423
      %1555 = vmatprep.subr.mxu0 0.0
      %1556 = vmatpush1.msra.mxu0 %v1422
      %1557 = vmatprep.subr.mxu0 0.0
      %1558 = vmatpush1.msra.mxu0 %v1421
      %1559 = vmatprep.subr.mxu0 0.0
      %1560 = vmatpush1.msra.mxu0 %v1420
      %1561 = vmatprep.subr.mxu0 0.0
      %1562 = vmatpush1.msra.mxu0 %v1419
      %1563 = vmatprep.subr.mxu0 0.0
      %1564 = vmatpush2.msra.mxu0 0.0
      %1565 = vmatprep.subr.mxu0 0.0
      %1566 = vmatpush2.msra.mxu0 0.0
      %1567 = vmatprep.subr.mxu0 0.0
      %1568 = vmatpush2.msra.mxu0 0.0
      %1569 = vmatprep.subr.mxu0 0.0
      %1570 = vmatpush2.msra.mxu0 0.0
      %1571 = vmatprep.subr.mxu0 0.0
      %1572 = vmatpush2.msra.mxu0 0.0
      %1573 = vmatprep.subr.mxu0 0.0
      %1574 = vmatpush2.msra.mxu0 0.0
      %1575 = vmatprep.subr.mxu0 0.0
      %1576 = vmatpush2.msra.mxu0 0.0
      %1577 = vmatprep.subr.mxu0 0.0
      %1578 = vmatpush2.msra.mxu0 0.0
      %1579 = vmatprep.subr.mxu0 0.0
      %1580 = vmatpush2.msra.mxu0 0.0
      %1581 = vmatprep.subr.mxu0 0.0
      %1582 = vmatpush2.msra.mxu0 0.0
      %1583 = vmatprep.subr.mxu0 0.0
      %1584 = vmatpush2.msra.mxu0 0.0
      %1585 = vmatprep.subr.mxu0 0.0
      %1586 = vmatpush2.msra.mxu0 0.0
      %1587 = vmatprep.subr.mxu0 0.0
      %1588 = vmatpush2.msra.mxu0 0.0
      %1589 = vmatprep.subr.mxu0 0.0
      %1590 = vmatpush2.msra.mxu0 0.0
      %1591 = vmatprep.subr.mxu0 0.0
      %1592 = vmatpush2.msra.mxu0 0.0
      %1593 = vmatprep.subr.mxu0 0.0
      %1594 = vmatpush2.msra.mxu0 0.0
      %1595 = vmatprep.mubr.f32.mxu0 0.0
      %1596 = vmatmul.mubr.f32.gmra.mxu0 %v1524
      %v1597 = vpop.f32.mrf.mxu0
      %v1598 = vadd.f32 %v1529, %v1597
      %v1599 = vpop.f32.mrf.mxu0
      %1600 = vdwg.mxu0
      %v1601 = vld [vmem:[%s7] sm:$0x3]
      %v1602 = vld [vmem:[%s8] sm:$0x3]
      %1604 = vset.pattern.permute.xlu0 0
      %1605 = vperm.xlu0 %1604, %v1602
      %v1606 = vpop.permute.xlu0 %1605
      %1608 = vmatprep.subr.mxu0 0.0
      %1609 = vmatpush1.msra.mxu0 %v1434
      %1610 = vmatprep.subr.mxu0 0.0
      %1611 = vmatpush1.msra.mxu0 %v1433
      %1612 = vmatprep.subr.mxu0 0.0
      %1613 = vmatpush1.msra.mxu0 %v1432
      %1614 = vmatprep.subr.mxu0 0.0
      %1615 = vmatpush1.msra.mxu0 %v1431
      %1616 = vmatprep.subr.mxu0 0.0
      %1617 = vmatpush1.msra.mxu0 %v1430
      %1618 = vmatprep.subr.mxu0 0.0
      %1619 = vmatpush1.msra.mxu0 %v1429
      %1620 = vmatprep.subr.mxu0 0.0
      %1621 = vmatpush1.msra.mxu0 %v1428
      %1622 = vmatprep.subr.mxu0 0.0
      %1623 = vmatpush1.msra.mxu0 %v1427
      %1624 = vmatprep.subr.mxu0 0.0
      %1625 = vmatpush1.msra.mxu0 %v1426
      %1626 = vmatprep.subr.mxu0 0.0
      %1627 = vmatpush1.msra.mxu0 %v1425
      %1628 = vmatprep.subr.mxu0 0.0
      %1629 = vmatpush1.msra.mxu0 %v1424
      %1630 = vmatprep.subr.mxu0 0.0
      %1631 = vmatpush1.msra.mxu0 %v1423
      %1632 = vmatprep.subr.mxu0 0.0
      %1633 = vmatpush1.msra.mxu0 %v1422
      %1634 = vmatprep.subr.mxu0 0.0
      %1635 = vmatpush1.msra.mxu0 %v1421
      %1636 = vmatprep.subr.mxu0 0.0
      %1637 = vmatpush1.msra.mxu0 %v1420
      %1638 = vmatprep.subr.mxu0 0.0
      %1639 = vmatpush1.msra.mxu0 %v1419
      %1640 = vmatprep.subr.mxu0 0.0
      %1641 = vmatpush2.msra.mxu0 0.0
      %1642 = vmatprep.subr.mxu0 0.0
      %1643 = vmatpush2.msra.mxu0 0.0
      %1644 = vmatprep.subr.mxu0 0.0
      %1645 = vmatpush2.msra.mxu0 0.0
      %1646 = vmatprep.subr.mxu0 0.0
      %1647 = vmatpush2.msra.mxu0 0.0
      %1648 = vmatprep.subr.mxu0 0.0
      %1649 = vmatpush2.msra.mxu0 0.0
      %1650 = vmatprep.subr.mxu0 0.0
      %1651 = vmatpush2.msra.mxu0 0.0
      %1652 = vmatprep.subr.mxu0 0.0
      %1653 = vmatpush2.msra.mxu0 0.0
      %1654 = vmatprep.subr.mxu0 0.0
      %1655 = vmatpush2.msra.mxu0 0.0
      %1656 = vmatprep.subr.mxu0 0.0
      %1657 = vmatpush2.msra.mxu0 0.0
      %1658 = vmatprep.subr.mxu0 0.0
      %1659 = vmatpush2.msra.mxu0 0.0
      %1660 = vmatprep.subr.mxu0 0.0
      %1661 = vmatpush2.msra.mxu0 0.0
      %1662 = vmatprep.subr.mxu0 0.0
      %1663 = vmatpush2.msra.mxu0 0.0
      %1664 = vmatprep.subr.mxu0 0.0
      %1665 = vmatpush2.msra.mxu0 0.0
      %1666 = vmatprep.subr.mxu0 0.0
      %1667 = vmatpush2.msra.mxu0 0.0
      %1668 = vmatprep.subr.mxu0 0.0
      %1669 = vmatpush2.msra.mxu0 0.0
      %1670 = vmatprep.subr.mxu0 0.0
      %1671 = vmatpush2.msra.mxu0 0.0
      %1672 = vmatprep.mubr.f32.mxu0 0.0
      %1673 = vmatmul.mubr.f32.gmra.mxu0 %v1601
      %v1674 = vpop.f32.mrf.mxu0
      %v1675 = vadd.f32 %v1606, %v1674
      %v1676 = vpop.f32.mrf.mxu0
      %1677 = vdwg.mxu0
      %vm1678 = vcmask 130048
      %1679 = vst.msk [vmem:[%s440] sm:$0xff] %vm1678, %v1516
      %vm1680 = vcmask 123904
      %1681 = vst.msk [vmem:[%s440 + $0x8] sm:$0x3] %vm1680, %v1521
      %1682 = vst.msk [vmem:[%s447] sm:$0x3] %vm1680, %v1598
      %v1683 = vmul.f32 %v1675, 1.442695
      %v1684 = vpow.pop %v1683
      %1685 = vst.msk [vmem:[%s454] sm:$0x3] %vm1680, %v1684
      %p1686 = scmp.lt.s32.totalorder %s27, 1
      %s1687 = scalar_select %p1686, %s27, 1
      %p1688 = scmp.lt.s32.totalorder %s28, 0
      %s1689 = scalar_select %p1688, %s28, 0
      %s1690 = smul.addr %s1687, 2
      %s1691 = sadd.s32 %s1689, %s1690
      %s1692 = smul.addr %s1691, 8
      %s1693 = scalar_lea.vmem %s9, %s1692
      %p1694 = scmp.lt.s32.totalorder %s27, 1
      %s1695 = scalar_select %p1694, %s27, 1
      %p1696 = scmp.lt.s32.totalorder %s28, 0
      %s1697 = scalar_select %p1696, %s28, 0
      %s1698 = sadd.s32 %s1697, %s1695
      %s1699 = smul.addr %s1698, 2
      %s1700 = scalar_lea.vmem %s10, %s1699
      %p1701 = scmp.lt.s32.totalorder %s27, 1
      %s1702 = scalar_select %p1701, %s27, 1
      %p1703 = scmp.lt.s32.totalorder %s28, 0
      %s1704 = scalar_select %p1703, %s28, 0
      %s1705 = sadd.s32 %s1704, %s1702
      %s1706 = smul.addr %s1705, 2
      %s1707 = scalar_lea.vmem %s11, %s1706
      // Predicated region
      $region57: #{q_forward.1} parent=55 // pred_check
        %p1708 = pneg %p251
      $region58: #{q_forward.1} parent=55 // pred_check_branch
        %1710 = sbr.rel (%p1708) target = $region60
      $region59: #{q_forward.1} parent=55 // pred_region
        _
      $region60: #{q_forward.1} parent=55 // pred_fallthru
        _
      // Predicated region
      $region61: #{q_forward.1} parent=55 // pred_check
        %p1711 = pneg %p279
      $region62: #{q_forward.1} parent=55 // pred_check_branch
        %1713 = sbr.rel (%p1711) target = $region64
      $region63: #{q_forward.1} parent=55 // pred_region
        _
      $region64: #{q_forward.1} parent=55 // pred_fallthru
        _
      // Predicated region
      $region65: #{q_forward.1} parent=55 // pred_check
        %p1714 = pneg %p307
      $region66: #{q_forward.1} parent=55 // pred_check_branch
        %1716 = sbr.rel (%p1714) target = $region68
      $region67: #{q_forward.1} parent=55 // pred_region
        _
      $region68: #{q_forward.1} parent=55 // pred_fallthru
        _
    $region56: #{q_forward.1} parent=5 // pred_fallthru
      _
    %p1717 = scmp.le.s32.totalorder 2, %s18
    // Predicated region
    $region69: #{q_forward.1} parent=5 // pred_check
      %p1718 = pneg %p1717
    $region70: #{q_forward.1} parent=5 // pred_check_branch
      %1720 = sbr.rel (%p1718) target = $region72
    $region71: #{q_forward.1} parent=5 // pred_region
      %s1721 = ssub.s32 %s18, 2
      // Predicated region
      $region73: #{q_forward.1} parent=71 // pred_check
        %p1722 = pneg %p257
      $region74: #{q_forward.1} parent=71 // pred_check_branch
        %1724 = sbr.rel (%p1722) target = $region76
      $region75: #{q_forward.1} parent=71 // pred_region
        %p1725 = scmp.lt.s32.totalorder %s29, 1
        %s1726 = scalar_select %p1725, %s29, 1
        %p1727 = scmp.lt.s32.totalorder %s30, 0
        %s1728 = scalar_select %p1727, %s30, 0
        %s1729 = smul.addr %s1726, 2
        %s1730 = sadd.s32 %s1728, %s1729
        %s1731 = smul.addr %s1730, 8
        %s1732 = scalar_lea.vmem %s9, %s1731
      $region76: #{q_forward.1} parent=71 // pred_fallthru
        _
      // Predicated region
      $region77: #{q_forward.1} parent=71 // pred_check
        %p1733 = pneg %p285
      $region78: #{q_forward.1} parent=71 // pred_check_branch
        %1735 = sbr.rel (%p1733) target = $region80
      $region79: #{q_forward.1} parent=71 // pred_region
        %p1736 = scmp.lt.s32.totalorder %s29, 1
        %s1737 = scalar_select %p1736, %s29, 1
        %p1738 = scmp.lt.s32.totalorder %s30, 0
        %s1739 = scalar_select %p1738, %s30, 0
        %s1740 = sadd.s32 %s1739, %s1737
        %s1741 = smul.addr %s1740, 2
        %s1742 = scalar_lea.vmem %s10, %s1741
      $region80: #{q_forward.1} parent=71 // pred_fallthru
        _
      // Predicated region
      $region81: #{q_forward.1} parent=71 // pred_check
        %p1743 = pneg %p313
      $region82: #{q_forward.1} parent=71 // pred_check_branch
        %1745 = sbr.rel (%p1743) target = $region84
      $region83: #{q_forward.1} parent=71 // pred_region
        %p1746 = scmp.lt.s32.totalorder %s29, 1
        %s1747 = scalar_select %p1746, %s29, 1
        %p1748 = scmp.lt.s32.totalorder %s30, 0
        %s1749 = scalar_select %p1748, %s30, 0
        %s1750 = sadd.s32 %s1749, %s1747
        %s1751 = smul.addr %s1750, 2
        %s1752 = scalar_lea.vmem %s11, %s1751
      $region84: #{q_forward.1} parent=71 // pred_fallthru
        _
    $region72: #{q_forward.1} parent=5 // pred_fallthru
      _
  $region6: #{q_forward.1} parent=0 // loop_footer
    %s22 = sadd.s32 1, %s18
  $region7: #{q_forward.1} parent=0 // loop_footer_branch
    %17 = sbr.rel target = $region3
  $region8: #{q_forward.1} parent=0 // loop_exit
    _

</llo_original>
